<compile_context>
chip_gen: v7x
topology: tpu7x:2x2x1
jax: 0.10.0
libtpu: 0.0.40
codegen_flags: <defaults>
</compile_context>

<pallas_src>
import jax
import jax.numpy as jnp
import numpy as np
from jax import lax
from jax.experimental import pallas as pl
from jax.experimental.pallas import tpu as pltpu


def _make_conv_kernel(OH, OW, C_in, C_out, KH, KW):
    def kernel(x_ref, w_ref, b_ref, o_ref):
        # x_ref: (4, Hh, Wh, C_in)  space-to-depth padded input for one batch:
        #        x_ref[ph*2+pw, jh, jw, c] == x_pad[2*jh+ph, 2*jw+pw, c]
        # w_ref: (KH*KW, C_out, C_in)
        # b_ref: (C_out, 1)
        # o_ref: (C_out, OH*OW)   lane-dense output block
        acc = jnp.zeros((C_out, OH * OW), jnp.float32)
        for kh in range(KH):          # static unroll: 9 taps
            for kw in range(KW):
                p = (kh % 2) * 2 + (kw % 2)
                hs, ws = kh // 2, kw // 2
                tap = x_ref[p, hs:hs + OH, ws:ws + OW, :]     # (OH, OW, C_in)
                tap2d = tap.reshape(OH * OW, C_in)            # (M_b, C_in)
                w_t = w_ref[kh * KW + kw]                     # (C_out, C_in)
                # (C_out, C_in) x (M_b, C_in)^T -> (C_out, M_b), f32 MXU acc.
                acc = acc + lax.dot_general(
                    w_t, tap2d, (((1,), (1,)), ((), ())),
                    preferred_element_type=jnp.float32)
        o_ref[...] = (acc + b_ref[...]).astype(o_ref.dtype)
    return kernel


def conv2d_s2p1_pallas(x_nchw, weight, bias):
    """Conv2d(C_in -> C_out, k=3, stride=2, padding=1), NCHW in / NCHW out."""
    N, C_in, H, W = x_nchw.shape
    C_out, C_in_w, KH, KW = weight.shape
    assert C_in == C_in_w, f"channel mismatch: input {C_in} vs weight {C_in_w}"
    assert KH == 3 and KW == 3
    assert H % 2 == 0 and W % 2 == 0, "even spatial dims required"
    stride, padding = 2, 1
    OH = (H + 2 * padding - KH) // stride + 1     # == H // 2
    OW = (W + 2 * padding - KW) // stride + 1     # == W // 2
    Hh, Wh = (H + 2 * padding) // 2, (W + 2 * padding) // 2

    # ---- glue (input): NCHW -> NHWC, zero-pad, stride-2 parity split.
    # This is the only host-side data movement; no im2col patch matrix.
    x = jnp.transpose(x_nchw, (0, 2, 3, 1))
    x = jnp.pad(x, ((0, 0), (padding, padding), (padding, padding), (0, 0)))
    x = x.reshape(N, Hh, 2, Wh, 2, C_in).transpose(0, 2, 4, 1, 3, 5)
    x = x.reshape(N, 4, Hh, Wh, C_in)             # x[n, ph*2+pw, jh, jw, c]

    # ---- glue (params): weight (C_out,C_in,KH,KW) -> (KH*KW, C_out, C_in)
    w_prep = jnp.transpose(weight, (2, 3, 0, 1)).reshape(KH * KW, C_out, C_in)
    b_col = bias.reshape(C_out, 1)

    kernel = _make_conv_kernel(OH, OW, C_in, C_out, KH, KW)
    out = pl.pallas_call(
        kernel,
        out_shape=jax.ShapeDtypeStruct((N, C_out, OH * OW), x_nchw.dtype),
        grid_spec=pltpu.PrefetchScalarGridSpec(
            num_scalar_prefetch=0,
            grid=(N,),
            in_specs=[
                pl.BlockSpec((None, 4, Hh, Wh, C_in),
                             lambda n: (n, 0, 0, 0, 0)),
                pl.BlockSpec((KH * KW, C_out, C_in), lambda n: (0, 0, 0)),
                pl.BlockSpec((C_out, 1), lambda n: (0, 0)),
            ],
            out_specs=pl.BlockSpec((None, C_out, OH * OW),
                                   lambda n: (n, 0, 0)),
        ),
        compiler_params=pltpu.CompilerParams(
            dimension_semantics=("parallel",),
            allow_input_fusion=[True, False, False],
            vmem_limit_bytes=32 * 1024 * 1024,
        ),
    )(x, w_prep, b_col)

    return out.reshape(N, C_out, OH, OW)          # free reshape -> NCHW


def model_forward(x1, weight, bias):
    v1 = conv2d_s2p1_pallas(x1, weight, bias)
    # TODO(synk): reference does v2 = self.layer(v1), which is invalid
    #             (Conv2d(16->32) applied to 32-channel v1); returning v1.
    return v1


if __name__ == "__main__":
    key = jax.random.PRNGKey(0)
    kx, kw, kb = jax.random.split(key, 3)
    # Small shapes consistent with the module: batch=2, C_in=16 (required by
    # the conv), spatial 32x32 (module declares 56x56; 32 keeps the demo small
    # and gives a 256-wide lane-dense output block per batch element).
    x1 = jax.random.normal(kx, (2, 16, 32, 32), dtype=jnp.float32)
    weight = jax.random.normal(kw, (32, 16, 3, 3), dtype=jnp.float32) * 0.05
    bias = jax.random.normal(kb, (32,), dtype=jnp.float32) * 0.05

    out = jax.jit(model_forward)(x1, weight, bias)
    out = jax.block_until_ready(out)
    assert out.shape == (2, 32, 16, 16), out.shape

    # Cross-check against XLA's native convolution.
    ref = lax.conv_general_dilated(
        x1, weight, window_strides=(2, 2), padding=((1, 1), (1, 1)),
        dimension_numbers=("NCHW", "OIHW", "NCHW")) + bias.reshape(1, 32, 1, 1)
    np.testing.assert_allclose(np.asarray(out), np.asarray(ref),
                               rtol=1e-4, atol=1e-4)

    print("KERNEL_OK")
</pallas_src>

<mosaic_0001>
module attributes {stable_mosaic.version = 11 : i64} {
  func.func @kernel(%arg0: i32, %arg1: memref<1x4x17x17x16xf32, #tpu.memory_space<vmem>>, %arg2: memref<9x32x16xf32, #tpu.memory_space<vmem>>, %arg3: memref<32x1xf32, #tpu.memory_space<vmem>>, %arg4: memref<1x32x256xf32, #tpu.memory_space<vmem>>) attributes {dimension_semantics = [#tpu.dimension_semantics<parallel>], iteration_bounds = array<i64: 2>, scalar_prefetch = 0 : i64, scratch_operands = 0 : i64, tpu.core_type = #tpu.core_type<tc>, window_params = [{transform_indices = @transform_0, window_bounds = array<i64: 1, 4, 17, 17, 16>}, {pipeline_mode = #tpu.pipeline_mode<synchronous>, transform_indices = @transform_1, window_bounds = array<i64: 9, 32, 16>}, {pipeline_mode = #tpu.pipeline_mode<synchronous>, transform_indices = @transform_2, window_bounds = array<i64: 32, 1>}, {transform_indices = @transform_3, window_bounds = array<i64: 1, 32, 256>}]} {
    %cst = arith.constant 0.000000e+00 : f32
    %0 = vector.broadcast %cst : f32 to vector<32x256xf32>
    %c0 = arith.constant 0 : index
    %c0_0 = arith.constant 0 : index
    %c0_1 = arith.constant 0 : index
    %c0_2 = arith.constant 0 : index
    %c0_3 = arith.constant 0 : index
    %1 = vector.load %arg1[%c0, %c0_0, %c0_1, %c0_2, %c0_3] : memref<1x4x17x17x16xf32, #tpu.memory_space<vmem>>, vector<1x1x16x16x16xf32>
    %2 = vector.shape_cast %1 : vector<1x1x16x16x16xf32> to vector<16x16x16xf32>
    %3 = vector.shape_cast %2 : vector<16x16x16xf32> to vector<256x16xf32>
    %c0_4 = arith.constant 0 : index
    %c0_5 = arith.constant 0 : index
    %c0_6 = arith.constant 0 : index
    %4 = vector.load %arg2[%c0_4, %c0_5, %c0_6] : memref<9x32x16xf32, #tpu.memory_space<vmem>>, vector<1x32x16xf32>
    %5 = vector.shape_cast %4 : vector<1x32x16xf32> to vector<32x16xf32>
    %cst_7 = arith.constant dense<0.000000e+00> : vector<32x256xf32>
    %6 = tpu.matmul %5, %3, %cst_7 {dimension_numbers = #tpu.dot_dimension_numbers<[1], [1], [0], [0], [0, 0, 1, 0], [], []>} : vector<32x16xf32>, vector<256x16xf32>, vector<32x256xf32> -> vector<32x256xf32>
    %7 = arith.addf %0, %6 : vector<32x256xf32>
    %c0_8 = arith.constant 0 : index
    %c1 = arith.constant 1 : index
    %c0_9 = arith.constant 0 : index
    %c0_10 = arith.constant 0 : index
    %c0_11 = arith.constant 0 : index
    %8 = vector.load %arg1[%c0_8, %c1, %c0_9, %c0_10, %c0_11] : memref<1x4x17x17x16xf32, #tpu.memory_space<vmem>>, vector<1x1x16x16x16xf32>
    %9 = vector.shape_cast %8 : vector<1x1x16x16x16xf32> to vector<16x16x16xf32>
    %10 = vector.shape_cast %9 : vector<16x16x16xf32> to vector<256x16xf32>
    %c1_12 = arith.constant 1 : index
    %c0_13 = arith.constant 0 : index
    %c0_14 = arith.constant 0 : index
    %11 = vector.load %arg2[%c1_12, %c0_13, %c0_14] : memref<9x32x16xf32, #tpu.memory_space<vmem>>, vector<1x32x16xf32>
    %12 = vector.shape_cast %11 : vector<1x32x16xf32> to vector<32x16xf32>
    %cst_15 = arith.constant dense<0.000000e+00> : vector<32x256xf32>
    %13 = tpu.matmul %12, %10, %cst_15 {dimension_numbers = #tpu.dot_dimension_numbers<[1], [1], [0], [0], [0, 0, 1, 0], [], []>} : vector<32x16xf32>, vector<256x16xf32>, vector<32x256xf32> -> vector<32x256xf32>
    %14 = arith.addf %7, %13 : vector<32x256xf32>
    %c0_16 = arith.constant 0 : index
    %c0_17 = arith.constant 0 : index
    %c0_18 = arith.constant 0 : index
    %c1_19 = arith.constant 1 : index
    %c0_20 = arith.constant 0 : index
    %15 = vector.load %arg1[%c0_16, %c0_17, %c0_18, %c1_19, %c0_20] : memref<1x4x17x17x16xf32, #tpu.memory_space<vmem>>, vector<1x1x16x16x16xf32>
    %16 = vector.shape_cast %15 : vector<1x1x16x16x16xf32> to vector<16x16x16xf32>
    %17 = vector.shape_cast %16 : vector<16x16x16xf32> to vector<256x16xf32>
    %c2 = arith.constant 2 : index
    %c0_21 = arith.constant 0 : index
    %c0_22 = arith.constant 0 : index
    %18 = vector.load %arg2[%c2, %c0_21, %c0_22] : memref<9x32x16xf32, #tpu.memory_space<vmem>>, vector<1x32x16xf32>
    %19 = vector.shape_cast %18 : vector<1x32x16xf32> to vector<32x16xf32>
    %cst_23 = arith.constant dense<0.000000e+00> : vector<32x256xf32>
    %20 = tpu.matmul %19, %17, %cst_23 {dimension_numbers = #tpu.dot_dimension_numbers<[1], [1], [0], [0], [0, 0, 1, 0], [], []>} : vector<32x16xf32>, vector<256x16xf32>, vector<32x256xf32> -> vector<32x256xf32>
    %21 = arith.addf %14, %20 : vector<32x256xf32>
    %c0_24 = arith.constant 0 : index
    %c2_25 = arith.constant 2 : index
    %c0_26 = arith.constant 0 : index
    %c0_27 = arith.constant 0 : index
    %c0_28 = arith.constant 0 : index
    %22 = vector.load %arg1[%c0_24, %c2_25, %c0_26, %c0_27, %c0_28] : memref<1x4x17x17x16xf32, #tpu.memory_space<vmem>>, vector<1x1x16x16x16xf32>
    %23 = vector.shape_cast %22 : vector<1x1x16x16x16xf32> to vector<16x16x16xf32>
    %24 = vector.shape_cast %23 : vector<16x16x16xf32> to vector<256x16xf32>
    %c3 = arith.constant 3 : index
    %c0_29 = arith.constant 0 : index
    %c0_30 = arith.constant 0 : index
    %25 = vector.load %arg2[%c3, %c0_29, %c0_30] : memref<9x32x16xf32, #tpu.memory_space<vmem>>, vector<1x32x16xf32>
    %26 = vector.shape_cast %25 : vector<1x32x16xf32> to vector<32x16xf32>
    %cst_31 = arith.constant dense<0.000000e+00> : vector<32x256xf32>
    %27 = tpu.matmul %26, %24, %cst_31 {dimension_numbers = #tpu.dot_dimension_numbers<[1], [1], [0], [0], [0, 0, 1, 0], [], []>} : vector<32x16xf32>, vector<256x16xf32>, vector<32x256xf32> -> vector<32x256xf32>
    %28 = arith.addf %21, %27 : vector<32x256xf32>
    %c0_32 = arith.constant 0 : index
    %c3_33 = arith.constant 3 : index
    %c0_34 = arith.constant 0 : index
    %c0_35 = arith.constant 0 : index
    %c0_36 = arith.constant 0 : index
    %29 = vector.load %arg1[%c0_32, %c3_33, %c0_34, %c0_35, %c0_36] : memref<1x4x17x17x16xf32, #tpu.memory_space<vmem>>, vector<1x1x16x16x16xf32>
    %30 = vector.shape_cast %29 : vector<1x1x16x16x16xf32> to vector<16x16x16xf32>
    %31 = vector.shape_cast %30 : vector<16x16x16xf32> to vector<256x16xf32>
    %c4 = arith.constant 4 : index
    %c0_37 = arith.constant 0 : index
    %c0_38 = arith.constant 0 : index
    %32 = vector.load %arg2[%c4, %c0_37, %c0_38] : memref<9x32x16xf32, #tpu.memory_space<vmem>>, vector<1x32x16xf32>
    %33 = vector.shape_cast %32 : vector<1x32x16xf32> to vector<32x16xf32>
    %cst_39 = arith.constant dense<0.000000e+00> : vector<32x256xf32>
    %34 = tpu.matmul %33, %31, %cst_39 {dimension_numbers = #tpu.dot_dimension_numbers<[1], [1], [0], [0], [0, 0, 1, 0], [], []>} : vector<32x16xf32>, vector<256x16xf32>, vector<32x256xf32> -> vector<32x256xf32>
    %35 = arith.addf %28, %34 : vector<32x256xf32>
    %c0_40 = arith.constant 0 : index
    %c2_41 = arith.constant 2 : index
    %c0_42 = arith.constant 0 : index
    %c1_43 = arith.constant 1 : index
    %c0_44 = arith.constant 0 : index
    %36 = vector.load %arg1[%c0_40, %c2_41, %c0_42, %c1_43, %c0_44] : memref<1x4x17x17x16xf32, #tpu.memory_space<vmem>>, vector<1x1x16x16x16xf32>
    %37 = vector.shape_cast %36 : vector<1x1x16x16x16xf32> to vector<16x16x16xf32>
    %38 = vector.shape_cast %37 : vector<16x16x16xf32> to vector<256x16xf32>
    %c5 = arith.constant 5 : index
    %c0_45 = arith.constant 0 : index
    %c0_46 = arith.constant 0 : index
    %39 = vector.load %arg2[%c5, %c0_45, %c0_46] : memref<9x32x16xf32, #tpu.memory_space<vmem>>, vector<1x32x16xf32>
    %40 = vector.shape_cast %39 : vector<1x32x16xf32> to vector<32x16xf32>
    %cst_47 = arith.constant dense<0.000000e+00> : vector<32x256xf32>
    %41 = tpu.matmul %40, %38, %cst_47 {dimension_numbers = #tpu.dot_dimension_numbers<[1], [1], [0], [0], [0, 0, 1, 0], [], []>} : vector<32x16xf32>, vector<256x16xf32>, vector<32x256xf32> -> vector<32x256xf32>
    %42 = arith.addf %35, %41 : vector<32x256xf32>
    %c0_48 = arith.constant 0 : index
    %c0_49 = arith.constant 0 : index
    %c1_50 = arith.constant 1 : index
    %c0_51 = arith.constant 0 : index
    %c0_52 = arith.constant 0 : index
    %43 = vector.load %arg1[%c0_48, %c0_49, %c1_50, %c0_51, %c0_52] : memref<1x4x17x17x16xf32, #tpu.memory_space<vmem>>, vector<1x1x16x16x16xf32>
    %44 = vector.shape_cast %43 : vector<1x1x16x16x16xf32> to vector<16x16x16xf32>
    %45 = vector.shape_cast %44 : vector<16x16x16xf32> to vector<256x16xf32>
    %c6 = arith.constant 6 : index
    %c0_53 = arith.constant 0 : index
    %c0_54 = arith.constant 0 : index
    %46 = vector.load %arg2[%c6, %c0_53, %c0_54] : memref<9x32x16xf32, #tpu.memory_space<vmem>>, vector<1x32x16xf32>
    %47 = vector.shape_cast %46 : vector<1x32x16xf32> to vector<32x16xf32>
    %cst_55 = arith.constant dense<0.000000e+00> : vector<32x256xf32>
    %48 = tpu.matmul %47, %45, %cst_55 {dimension_numbers = #tpu.dot_dimension_numbers<[1], [1], [0], [0], [0, 0, 1, 0], [], []>} : vector<32x16xf32>, vector<256x16xf32>, vector<32x256xf32> -> vector<32x256xf32>
    %49 = arith.addf %42, %48 : vector<32x256xf32>
    %c0_56 = arith.constant 0 : index
    %c1_57 = arith.constant 1 : index
    %c1_58 = arith.constant 1 : index
    %c0_59 = arith.constant 0 : index
    %c0_60 = arith.constant 0 : index
    %50 = vector.load %arg1[%c0_56, %c1_57, %c1_58, %c0_59, %c0_60] : memref<1x4x17x17x16xf32, #tpu.memory_space<vmem>>, vector<1x1x16x16x16xf32>
    %51 = vector.shape_cast %50 : vector<1x1x16x16x16xf32> to vector<16x16x16xf32>
    %52 = vector.shape_cast %51 : vector<16x16x16xf32> to vector<256x16xf32>
    %c7 = arith.constant 7 : index
    %c0_61 = arith.constant 0 : index
    %c0_62 = arith.constant 0 : index
    %53 = vector.load %arg2[%c7, %c0_61, %c0_62] : memref<9x32x16xf32, #tpu.memory_space<vmem>>, vector<1x32x16xf32>
    %54 = vector.shape_cast %53 : vector<1x32x16xf32> to vector<32x16xf32>
    %cst_63 = arith.constant dense<0.000000e+00> : vector<32x256xf32>
    %55 = tpu.matmul %54, %52, %cst_63 {dimension_numbers = #tpu.dot_dimension_numbers<[1], [1], [0], [0], [0, 0, 1, 0], [], []>} : vector<32x16xf32>, vector<256x16xf32>, vector<32x256xf32> -> vector<32x256xf32>
    %56 = arith.addf %49, %55 : vector<32x256xf32>
    %c0_64 = arith.constant 0 : index
    %c0_65 = arith.constant 0 : index
    %c1_66 = arith.constant 1 : index
    %c1_67 = arith.constant 1 : index
    %c0_68 = arith.constant 0 : index
    %57 = vector.load %arg1[%c0_64, %c0_65, %c1_66, %c1_67, %c0_68] : memref<1x4x17x17x16xf32, #tpu.memory_space<vmem>>, vector<1x1x16x16x16xf32>
    %58 = vector.shape_cast %57 : vector<1x1x16x16x16xf32> to vector<16x16x16xf32>
    %59 = vector.shape_cast %58 : vector<16x16x16xf32> to vector<256x16xf32>
    %c8 = arith.constant 8 : index
    %c0_69 = arith.constant 0 : index
    %c0_70 = arith.constant 0 : index
    %60 = vector.load %arg2[%c8, %c0_69, %c0_70] : memref<9x32x16xf32, #tpu.memory_space<vmem>>, vector<1x32x16xf32>
    %61 = vector.shape_cast %60 : vector<1x32x16xf32> to vector<32x16xf32>
    %cst_71 = arith.constant dense<0.000000e+00> : vector<32x256xf32>
    %62 = tpu.matmul %61, %59, %cst_71 {dimension_numbers = #tpu.dot_dimension_numbers<[1], [1], [0], [0], [0, 0, 1, 0], [], []>} : vector<32x16xf32>, vector<256x16xf32>, vector<32x256xf32> -> vector<32x256xf32>
    %63 = arith.addf %56, %62 : vector<32x256xf32>
    %c0_72 = arith.constant 0 : index
    %c0_73 = arith.constant 0 : index
    %64 = vector.load %arg3[%c0_72, %c0_73] : memref<32x1xf32, #tpu.memory_space<vmem>>, vector<32x1xf32>
    %65 = vector.broadcast %64 : vector<32x1xf32> to vector<32x256xf32>
    %66 = arith.addf %63, %65 : vector<32x256xf32>
    %c0_74 = arith.constant 0 : index
    %c0_75 = arith.constant 0 : index
    %c0_76 = arith.constant 0 : index
    %67 = vector.load %arg4[%c0_74, %c0_75, %c0_76] : memref<1x32x256xf32, #tpu.memory_space<vmem>>, vector<1x32x256xf32>
    %68 = vector.shape_cast %67 : vector<1x32x256xf32> to vector<32x256xf32>
    %69 = vector.shape_cast %66 : vector<32x256xf32> to vector<1x32x256xf32>
    tpu.vector_store %arg4[%c0_74, %c0_75, %c0_76], %69 {strides = array<i32>} : memref<1x32x256xf32, #tpu.memory_space<vmem>>, vector<1x32x256xf32>,
    return
  }
  func.func @transform_0(%arg0: i32) -> (i32, i32, i32, i32, i32) {
    %c0_i32 = arith.constant 0 : i32
    %c0_i32_0 = arith.constant 0 : i32
    %c0_i32_1 = arith.constant 0 : i32
    %c0_i32_2 = arith.constant 0 : i32
    %c0_i32_3 = arith.constant 0 : i32
    return %arg0, %c0_i32, %c0_i32_0, %c0_i32_1, %c0_i32_2 : i32, i32, i32, i32, i32
  }
  func.func @transform_1(%arg0: i32) -> (i32, i32, i32) {
    %c0_i32 = arith.constant 0 : i32
    %c0_i32_0 = arith.constant 0 : i32
    %c0_i32_1 = arith.constant 0 : i32
    %c0_i32_2 = arith.constant 0 : i32
    return %c0_i32, %c0_i32_0, %c0_i32_1 : i32, i32, i32
  }
  func.func @transform_2(%arg0: i32) -> (i32, i32) {
    %c0_i32 = arith.constant 0 : i32
    %c0_i32_0 = arith.constant 0 : i32
    %c0_i32_1 = arith.constant 0 : i32
    return %c0_i32, %c0_i32_0 : i32, i32
  }
  func.func @transform_3(%arg0: i32) -> (i32, i32, i32) {
    %c0_i32 = arith.constant 0 : i32
    %c0_i32_0 = arith.constant 0 : i32
    %c0_i32_1 = arith.constant 0 : i32
    return %arg0, %c0_i32, %c0_i32_0 : i32, i32, i32
  }
}

</mosaic_0001>

<llo_original>
// kernel: model_forward.1
$region0: #{model_forward.1}
  #allocation0 [shape = 'u32[]', space=smem, size = 0x4, offset = 0x4, fixed_abs, tag = 'smem constant byte address 0x4 - core index']
  #allocation1 [shape = 'u32[144,128]{1,0:T(1,128)}', space=vmem, size = 0x12000, scoped, tag = 'internal scratch']
  %s0 = inlined_call_operand.vmem [shape: f32[2,4,17,17,16], index: 0, kind: input, shape index: {}]
  %s1 = inlined_call_operand.vmem [shape: f32[9,32,16], index: 1, kind: input, shape index: {}]
  %s2 = inlined_call_operand.vmem [shape: f32[32,1], index: 2, kind: input, shape index: {}]
  %s3 = inlined_call_operand.vmem [shape: f32[2,32,256], index: 3, kind: output, shape index: {}]
  %s4 = sld [smem:[#allocation0]]
  $region45: #{model_forward.1} parent=0
    _
  %s6 = ssub.s32 1, %s4
  %s7 = scalar_select 0, %s6, %s4
  loop: start=0, step=1, limit=4
  $region2: #{model_forward.1} parent=0 // loop_pre_header
    _
  $region3: #{model_forward.1} parent=0 // loop_header
    %s9 = sphi 0, %s13
    %p10 = scmp.ge.s32.totalorder %s9, 4
    %s19 = sphi 0, %s21
    %s22 = sphi 0, %s19
    %s23 = sphi 0, %s22
    %s39 = sphi 0, %s23
    %s43 = sphi 0, %s43
    %s45 = sphi 0, %s43
    %s46 = sphi 0, %s45
    %s60 = sphi 0, %s46
    %s64 = sphi 0, %s64
    %s66 = sphi 0, %s64
    %s67 = sphi 0, %s66
    %s81 = sphi 0, %s67
    %s87 = sphi 0, %s89
    %s90 = sphi 0, %s87
    %s91 = sphi 0, %s90
    %s107 = sphi 0, %s91
  $region4: #{model_forward.1} parent=0 // loop_header_branch
    %12 = sbr.rel (%p10) target = $region8
  $region5: #{model_forward.1} parent=0 // loop_body
    %s14 = ssub.s32 %s9, 1
    %s15 = ssub.s32 %s9, 2
    %s16 = sadd.s32 %s9, 1
    %s17 = ssub.s32 %s9, %s16
    %p18 = scmp.eq.s32.totalorder %s17, 0
    %s20 = sadd.s32 %s19, 1
    %s21 = scalar_select %p18, %s19, %s20
    %p24 = pneg %p18
    %p25 = scmp.eq.s32.totalorder %s9, 1
    %p26 = por %p24, %p25
    %p27 = scmp.ne.s32.totalorder %s19, %s22
    %p28 = scmp.eq.s32.totalorder %s9, 0
    %p29 = por %p27, %p28
    %p30 = scmp.ne.s32.totalorder %s19, %s22
    %p31 = scmp.eq.s32.totalorder %s14, 1
    %p32 = por %p30, %p31
    %p33 = scmp.ne.s32.totalorder %s22, %s23
    %p34 = scmp.eq.s32.totalorder %s14, 0
    %p35 = por %p33, %p34
    %p36 = scmp.ne.s32.totalorder %s22, %s23
    %p37 = scmp.eq.s32.totalorder %s15, 1
    %p38 = por %p36, %p37
    %p40 = scmp.ne.s32.totalorder %s23, %s39
    %p41 = scmp.eq.s32.totalorder %s15, 0
    %p42 = por %p40, %p41
    %s44 = sadd.s32 %s43, 1
    %p47 = scmp.eq.s32.totalorder %s9, 1
    %p48 = scmp.ne.s32.totalorder %s43, %s45
    %p49 = scmp.eq.s32.totalorder %s9, 0
    %p50 = por %p48, %p49
    %p51 = scmp.ne.s32.totalorder %s43, %s45
    %p52 = scmp.eq.s32.totalorder %s14, 1
    %p53 = por %p51, %p52
    %p54 = scmp.ne.s32.totalorder %s45, %s46
    %p55 = scmp.eq.s32.totalorder %s14, 0
    %p56 = por %p54, %p55
    %p57 = scmp.ne.s32.totalorder %s45, %s46
    %p58 = scmp.eq.s32.totalorder %s15, 1
    %p59 = por %p57, %p58
    %p61 = scmp.ne.s32.totalorder %s46, %s60
    %p62 = scmp.eq.s32.totalorder %s15, 0
    %p63 = por %p61, %p62
    %s65 = sadd.s32 %s64, 1
    %p68 = scmp.eq.s32.totalorder %s9, 1
    %p69 = scmp.ne.s32.totalorder %s64, %s66
    %p70 = scmp.eq.s32.totalorder %s9, 0
    %p71 = por %p69, %p70
    %p72 = scmp.ne.s32.totalorder %s64, %s66
    %p73 = scmp.eq.s32.totalorder %s14, 1
    %p74 = por %p72, %p73
    %p75 = scmp.ne.s32.totalorder %s66, %s67
    %p76 = scmp.eq.s32.totalorder %s14, 0
    %p77 = por %p75, %p76
    %p78 = scmp.ne.s32.totalorder %s66, %s67
    %p79 = scmp.eq.s32.totalorder %s15, 1
    %p80 = por %p78, %p79
    %p82 = scmp.ne.s32.totalorder %s67, %s81
    %p83 = scmp.eq.s32.totalorder %s15, 0
    %p84 = por %p82, %p83
    %s85 = ssub.s32 %s9, %s16
    %p86 = scmp.eq.s32.totalorder %s85, 0
    %s88 = sadd.s32 %s87, 1
    %s89 = scalar_select %p86, %s87, %s88
    %p92 = pneg %p86
    %p93 = scmp.eq.s32.totalorder %s9, 1
    %p94 = por %p92, %p93
    %p95 = scmp.ne.s32.totalorder %s87, %s90
    %p96 = scmp.eq.s32.totalorder %s9, 0
    %p97 = por %p95, %p96
    %p98 = scmp.ne.s32.totalorder %s87, %s90
    %p99 = scmp.eq.s32.totalorder %s14, 1
    %p100 = por %p98, %p99
    %p101 = scmp.ne.s32.totalorder %s90, %s91
    %p102 = scmp.eq.s32.totalorder %s14, 0
    %p103 = por %p101, %p102
    %p104 = scmp.ne.s32.totalorder %s90, %s91
    %p105 = scmp.eq.s32.totalorder %s15, 1
    %p106 = por %p104, %p105
    %p108 = scmp.ne.s32.totalorder %s91, %s107
    %p109 = scmp.eq.s32.totalorder %s15, 0
    %p110 = por %p108, %p109
    %p111 = scmp.le.s32.totalorder 1, %s9
    %p112 = scmp.lt.s32.totalorder %s9, 3
    %p113 = pnand %p111, %p112
    %p114 = pneg %p113
    // Predicated region
    $region9: #{model_forward.1} parent=5 // pred_check
      _
    $region10: #{model_forward.1} parent=5 // pred_check_branch
      %116 = sbr.rel (%p113) target = $region12
    $region11: #{model_forward.1} parent=5 // pred_region
      %s117 = ssub.s32 %s9, 1
      // Predicated region
      $region13: #{model_forward.1} parent=11 // pred_check
        %p118 = pneg %p56
      $region14: #{model_forward.1} parent=11 // pred_check_branch
        %120 = sbr.rel (%p118) target = $region16
      $region15: #{model_forward.1} parent=11 // pred_region
        _
      $region16: #{model_forward.1} parent=11 // pred_fallthru
        _
      // Predicated region
      $region17: #{model_forward.1} parent=11 // pred_check
        %p121 = pneg %p77
      $region18: #{model_forward.1} parent=11 // pred_check_branch
        %123 = sbr.rel (%p121) target = $region20
      $region19: #{model_forward.1} parent=11 // pred_region
        _
      $region20: #{model_forward.1} parent=11 // pred_fallthru
        _
    $region12: #{model_forward.1} parent=5 // pred_fallthru
      _
    %p124 = scmp.lt.s32.totalorder %s9, 2
    // Predicated region
    $region21: #{model_forward.1} parent=5 // pred_check
      %p125 = pneg %p124
    $region22: #{model_forward.1} parent=5 // pred_check_branch
      %127 = sbr.rel (%p125) target = $region24
    $region23: #{model_forward.1} parent=5 // pred_region
      // Predicated region
      $region25: #{model_forward.1} parent=23 // pred_check
        %p128 = pneg %p29
      $region26: #{model_forward.1} parent=23 // pred_check_branch
        %130 = sbr.rel (%p128) target = $region28
      $region27: #{model_forward.1} parent=23 // pred_region
        %p131 = scmp.lt.s32.totalorder %s9, 1
        %s132 = scalar_select %p131, %s9, 1
        %s133 = smul.addr %s132, 204
        %s134 = smul.addr %s133, 8
        %s135 = scalar_lea.vmem %s0, %s134
      $region28: #{model_forward.1} parent=23 // pred_fallthru
        _
    $region24: #{model_forward.1} parent=5 // pred_fallthru
      _
    %p136 = scmp.le.s32.totalorder 1, %s9
    %p137 = scmp.lt.s32.totalorder %s9, 3
    %p138 = pnand %p136, %p137
    %p139 = pneg %p138
    // Predicated region
    $region29: #{model_forward.1} parent=5 // pred_check
      _
    $region30: #{model_forward.1} parent=5 // pred_check_branch
      %141 = sbr.rel (%p138) target = $region32
    $region31: #{model_forward.1} parent=5 // pred_region
      %s142 = ssub.s32 %s9, 1
      %p143 = scmp.lt.s32.totalorder %s14, 1
      %s144 = scalar_select %p143, %s14, 1
      %s145 = smul.addr %s144, 204
      %s146 = smul.addr %s145, 8
      %s147 = scalar_lea.vmem %s0, %s146
      %p148 = pneg %p35
      %p149 = pneg %p32
      %p150 = pneg %p56
      %p151 = pneg %p53
      %p152 = pneg %p77
      %p153 = pneg %p74
      %p154 = pneg %p103
      %p155 = pneg %p100
      %p156 = scmp.lt.s32.totalorder %s14, 1
      %s157 = scalar_select %p156, %s14, 1
      %s158 = smul.addr %s157, 8
      %s159 = smul.addr %s158, 8
      %s160 = scalar_lea.vmem %s3, %s159
      %p161 = scmp.lt.s32.totalorder %s14, 1
      %s162 = scalar_select %p161, %s14, 1
      %s163 = smul.addr %s162, 204
      %s164 = smul.addr %s163, 8
      %s165 = scalar_lea.vmem %s0, %s164
      %p166 = scmp.lt.s32.totalorder %s14, 1
      %s167 = scalar_select %p166, %s14, 1
      %s168 = smul.addr %s167, 8
      %s169 = smul.addr %s168, 8
      %s170 = scalar_lea.vmem %s3, %s169
      %v171 = vld [vmem:[%s165] sm:$0xff]
      %v172 = vld [vmem:[%s165 + $0x8] sm:$0xff]
      %v173 = vld [vmem:[%s165 + $0x18] sm:$0xff]
      %v174 = vld [vmem:[%s165 + $0x20] sm:$0xff]
      %v175 = vld [vmem:[%s165 + $0x30] sm:$0xff]
      %v176 = vld [vmem:[%s165 + $0x38] sm:$0xff]
      %v177 = vld [vmem:[%s165 + $0x48] sm:$0xff]
      %v178 = vld [vmem:[%s165 + $0x50] sm:$0xff]
      %v179 = vld [vmem:[%s165 + $0x60] sm:$0xff]
      %v180 = vld [vmem:[%s165 + $0x68] sm:$0xff]
      %v181 = vld [vmem:[%s165 + $0x78] sm:$0xff]
      %v182 = vld [vmem:[%s165 + $0x80] sm:$0xff]
      %v183 = vld [vmem:[%s165 + $0x90] sm:$0xff]
      %v184 = vld [vmem:[%s165 + $0x98] sm:$0xff]
      %v185 = vld [vmem:[%s165 + $0xa8] sm:$0xff]
      %v186 = vld [vmem:[%s165 + $0xb0] sm:$0xff]
      %v187 = vld [vmem:[%s165 + $0xc0] sm:$0xff]
      %v188 = vld [vmem:[%s165 + $0xc8] sm:$0xff]
      %v189 = vld [vmem:[%s165 + $0xd8] sm:$0xff]
      %v190 = vld [vmem:[%s165 + $0xe0] sm:$0xff]
      %v191 = vld [vmem:[%s165 + $0xf0] sm:$0xff]
      %v192 = vld [vmem:[%s165 + $0xf8] sm:$0xff]
      %v193 = vld [vmem:[%s165 + $0x108] sm:$0xff]
      %v194 = vld [vmem:[%s165 + $0x110] sm:$0xff]
      %v195 = vld [vmem:[%s165 + $0x120] sm:$0xff]
      %v196 = vld [vmem:[%s165 + $0x128] sm:$0xff]
      %v197 = vld [vmem:[%s165 + $0x138] sm:$0xff]
      %v198 = vld [vmem:[%s165 + $0x140] sm:$0xff]
      %v199 = vld [vmem:[%s165 + $0x150] sm:$0xff]
      %v200 = vld [vmem:[%s165 + $0x158] sm:$0xff]
      %v201 = vld [vmem:[%s165 + $0x168] sm:$0xff]
      %v202 = vld [vmem:[%s165 + $0x170] sm:$0xff]
      %v203 = vld [vmem:[%s1] sm:$0xff]
      %v204 = vld [vmem:[%s1 + $0x8] sm:$0xff]
      %v205 = vld [vmem:[%s1 + $0x10] sm:$0xff]
      %v206 = vld [vmem:[%s1 + $0x18] sm:$0xff]
      %s207 = scalar_lea.vmem %s165, 408
      %v208 = vld [vmem:[%s207] sm:$0xff]
      %v209 = vld [vmem:[%s207 + $0x8] sm:$0xff]
      %v210 = vld [vmem:[%s207 + $0x18] sm:$0xff]
      %v211 = vld [vmem:[%s207 + $0x20] sm:$0xff]
      %v212 = vld [vmem:[%s207 + $0x30] sm:$0xff]
      %v213 = vld [vmem:[%s207 + $0x38] sm:$0xff]
      %v214 = vld [vmem:[%s207 + $0x48] sm:$0xff]
      %v215 = vld [vmem:[%s207 + $0x50] sm:$0xff]
      %v216 = vld [vmem:[%s207 + $0x60] sm:$0xff]
      %v217 = vld [vmem:[%s207 + $0x68] sm:$0xff]
      %v218 = vld [vmem:[%s207 + $0x78] sm:$0xff]
      %v219 = vld [vmem:[%s207 + $0x80] sm:$0xff]
      %v220 = vld [vmem:[%s207 + $0x90] sm:$0xff]
      %v221 = vld [vmem:[%s207 + $0x98] sm:$0xff]
      %v222 = vld [vmem:[%s207 + $0xa8] sm:$0xff]
      %v223 = vld [vmem:[%s207 + $0xb0] sm:$0xff]
      %v224 = vld [vmem:[%s207 + $0xc0] sm:$0xff]
      %v225 = vld [vmem:[%s207 + $0xc8] sm:$0xff]
      %v226 = vld [vmem:[%s207 + $0xd8] sm:$0xff]
      %v227 = vld [vmem:[%s207 + $0xe0] sm:$0xff]
      %v228 = vld [vmem:[%s207 + $0xf0] sm:$0xff]
      %v229 = vld [vmem:[%s207 + $0xf8] sm:$0xff]
      %v230 = vld [vmem:[%s207 + $0x108] sm:$0xff]
      %v231 = vld [vmem:[%s207 + $0x110] sm:$0xff]
      %v232 = vld [vmem:[%s207 + $0x120] sm:$0xff]
      %v233 = vld [vmem:[%s207 + $0x128] sm:$0xff]
      %v234 = vld [vmem:[%s207 + $0x138] sm:$0xff]
      %v235 = vld [vmem:[%s207 + $0x140] sm:$0xff]
      %v236 = vld [vmem:[%s207 + $0x150] sm:$0xff]
      %v237 = vld [vmem:[%s207 + $0x158] sm:$0xff]
      %v238 = vld [vmem:[%s207 + $0x168] sm:$0xff]
      %v239 = vld [vmem:[%s207 + $0x170] sm:$0xff]
      %s240 = scalar_lea.vmem %s1, 32
      %v241 = vld [vmem:[%s240] sm:$0xff]
      %v242 = vld [vmem:[%s240 + $0x8] sm:$0xff]
      %v243 = vld [vmem:[%s240 + $0x10] sm:$0xff]
      %v244 = vld [vmem:[%s240 + $0x18] sm:$0xff]
      %vm245 = vcmask 130048
      %v247 = vsel %vm245, %v241, 0
      %v250 = vsel %vm245, %v242, 0
      %v253 = vsel %vm245, %v243, 0
      %v256 = vsel %vm245, %v244, 0
      %v259 = vsel %vm245, %v208, 0
      %v262 = vsel %vm245, %v209, 0
      %v265 = vsel %vm245, %v210, 0
      %v268 = vsel %vm245, %v211, 0
      %v271 = vsel %vm245, %v212, 0
      %v274 = vsel %vm245, %v213, 0
      %v277 = vsel %vm245, %v214, 0
      %v280 = vsel %vm245, %v215, 0
      %v283 = vsel %vm245, %v216, 0
      %v286 = vsel %vm245, %v217, 0
      %v289 = vsel %vm245, %v218, 0
      %v292 = vsel %vm245, %v219, 0
      %v295 = vsel %vm245, %v220, 0
      %v298 = vsel %vm245, %v221, 0
      %v301 = vsel %vm245, %v222, 0
      %v304 = vsel %vm245, %v223, 0
      %v307 = vsel %vm245, %v224, 0
      %v310 = vsel %vm245, %v225, 0
      %v313 = vsel %vm245, %v226, 0
      %v316 = vsel %vm245, %v227, 0
      %v319 = vsel %vm245, %v228, 0
      %v322 = vsel %vm245, %v229, 0
      %v325 = vsel %vm245, %v230, 0
      %v328 = vsel %vm245, %v231, 0
      %v331 = vsel %vm245, %v232, 0
      %v334 = vsel %vm245, %v233, 0
      %v337 = vsel %vm245, %v234, 0
      %v340 = vsel %vm245, %v235, 0
      %v343 = vsel %vm245, %v236, 0
      %v346 = vsel %vm245, %v237, 0
      %v349 = vsel %vm245, %v238, 0
      %v352 = vsel %vm245, %v239, 0
      %354 = vmatprep.subr.mxu0 0.0
      %355 = vmatpush1.xpose.msra.mxu0 %v259
      %356 = vmatprep.subr.mxu0 0.0
      %357 = vmatpush1.xpose.msra.mxu0 %v262
      %358 = vmatprep.subr.mxu0 0.0
      %359 = vmatpush1.xpose.msra.mxu0 %v265
      %360 = vmatprep.subr.mxu0 0.0
      %361 = vmatpush1.xpose.msra.mxu0 %v268
      %362 = vmatprep.subr.mxu0 0.0
      %363 = vmatpush1.xpose.msra.mxu0 %v271
      %364 = vmatprep.subr.mxu0 0.0
      %365 = vmatpush1.xpose.msra.mxu0 %v274
      %366 = vmatprep.subr.mxu0 0.0
      %367 = vmatpush1.xpose.msra.mxu0 %v277
      %368 = vmatprep.subr.mxu0 0.0
      %369 = vmatpush1.xpose.msra.mxu0 %v280
      %370 = vmatprep.subr.mxu0 0.0
      %371 = vmatpush1.xpose.msra.mxu0 %v283
      %372 = vmatprep.subr.mxu0 0.0
      %373 = vmatpush1.xpose.msra.mxu0 %v286
      %374 = vmatprep.subr.mxu0 0.0
      %375 = vmatpush1.xpose.msra.mxu0 %v289
      %376 = vmatprep.subr.mxu0 0.0
      %377 = vmatpush1.xpose.msra.mxu0 %v292
      %378 = vmatprep.subr.mxu0 0.0
      %379 = vmatpush1.xpose.msra.mxu0 %v295
      %380 = vmatprep.subr.mxu0 0.0
      %381 = vmatpush1.xpose.msra.mxu0 %v298
      %382 = vmatprep.subr.mxu0 0.0
      %383 = vmatpush1.xpose.msra.mxu0 %v301
      %384 = vmatprep.subr.mxu0 0.0
      %385 = vmatpush1.xpose.msra.mxu0 %v304
      %386 = vmatprep.subr.mxu0 0.0
      %387 = vmatpush1.xpose.msra.mxu0 %v307
      %388 = vmatprep.subr.mxu0 0.0
      %389 = vmatpush1.xpose.msra.mxu0 %v310
      %390 = vmatprep.subr.mxu0 0.0
      %391 = vmatpush1.xpose.msra.mxu0 %v313
      %392 = vmatprep.subr.mxu0 0.0
      %393 = vmatpush1.xpose.msra.mxu0 %v316
      %394 = vmatprep.subr.mxu0 0.0
      %395 = vmatpush1.xpose.msra.mxu0 %v319
      %396 = vmatprep.subr.mxu0 0.0
      %397 = vmatpush1.xpose.msra.mxu0 %v322
      %398 = vmatprep.subr.mxu0 0.0
      %399 = vmatpush1.xpose.msra.mxu0 %v325
      %400 = vmatprep.subr.mxu0 0.0
      %401 = vmatpush1.xpose.msra.mxu0 %v328
      %402 = vmatprep.subr.mxu0 0.0
      %403 = vmatpush1.xpose.msra.mxu0 %v331
      %404 = vmatprep.subr.mxu0 0.0
      %405 = vmatpush1.xpose.msra.mxu0 %v334
      %406 = vmatprep.subr.mxu0 0.0
      %407 = vmatpush1.xpose.msra.mxu0 %v337
      %408 = vmatprep.subr.mxu0 0.0
      %409 = vmatpush1.xpose.msra.mxu0 %v340
      %410 = vmatprep.subr.mxu0 0.0
      %411 = vmatpush1.xpose.msra.mxu0 %v343
      %412 = vmatprep.subr.mxu0 0.0
      %413 = vmatpush1.xpose.msra.mxu0 %v346
      %414 = vmatprep.subr.mxu0 0.0
      %415 = vmatpush1.xpose.msra.mxu0 %v349
      %416 = vmatprep.subr.mxu0 0.0
      %417 = vmatpush1.xpose.msra.mxu0 %v352
      %418 = vmatprep.mubr.f32.mxu0 0.0
      %419 = vmatmul.mubr.f32.gmra.mrb[0].mxu0 %v247
      %v420 = vpop.f32.mrb[0].mxu0
      %v421 = vadd.f32 0.0, %v420
      %v422 = vpop.f32.mrb[0].mxu0
      %v423 = vadd.f32 0.0, %v422
      %424 = vmatprep.mubr.f32.mxu0 0.0
      %425 = vmatmul.mubr.f32.gmra.mrb[0].mxu0 %v250
      %v426 = vpop.f32.mrb[0].mxu0
      %v427 = vadd.f32 0.0, %v426
      %v428 = vpop.f32.mrb[0].mxu0
      %v429 = vadd.f32 0.0, %v428
      %430 = vmatprep.mubr.f32.mxu0 0.0
      %431 = vmatmul.mubr.f32.gmra.mrb[0].mxu0 %v253
      %v432 = vpop.f32.mrb[0].mxu0
      %v433 = vadd.f32 0.0, %v432
      %v434 = vpop.f32.mrb[0].mxu0
      %v435 = vadd.f32 0.0, %v434
      %436 = vmatprep.mubr.f32.mxu0 0.0
      %437 = vmatmul.mubr.f32.gmra.mrb[0].mxu0 %v256
      %v438 = vpop.f32.mrb[0].mxu0
      %v439 = vadd.f32 0.0, %v438
      %v440 = vpop.f32.mrb[0].mxu0
      %v441 = vadd.f32 0.0, %v440
      %442 = vdwg.mxu0
      %v444 = vsel %vm245, %v203, 0
      %v447 = vsel %vm245, %v204, 0
      %v450 = vsel %vm245, %v205, 0
      %v453 = vsel %vm245, %v206, 0
      %v456 = vsel %vm245, %v171, 0
      %v459 = vsel %vm245, %v172, 0
      %v462 = vsel %vm245, %v173, 0
      %v465 = vsel %vm245, %v174, 0
      %v468 = vsel %vm245, %v175, 0
      %v471 = vsel %vm245, %v176, 0
      %v474 = vsel %vm245, %v177, 0
      %v477 = vsel %vm245, %v178, 0
      %v480 = vsel %vm245, %v179, 0
      %v483 = vsel %vm245, %v180, 0
      %v486 = vsel %vm245, %v181, 0
      %v489 = vsel %vm245, %v182, 0
      %v492 = vsel %vm245, %v183, 0
      %v495 = vsel %vm245, %v184, 0
      %v498 = vsel %vm245, %v185, 0
      %v501 = vsel %vm245, %v186, 0
      %v504 = vsel %vm245, %v187, 0
      %v507 = vsel %vm245, %v188, 0
      %v510 = vsel %vm245, %v189, 0
      %v513 = vsel %vm245, %v190, 0
      %v516 = vsel %vm245, %v191, 0
      %v519 = vsel %vm245, %v192, 0
      %v522 = vsel %vm245, %v193, 0
      %v525 = vsel %vm245, %v194, 0
      %v528 = vsel %vm245, %v195, 0
      %v531 = vsel %vm245, %v196, 0
      %v534 = vsel %vm245, %v197, 0
      %v537 = vsel %vm245, %v198, 0
      %v540 = vsel %vm245, %v199, 0
      %v543 = vsel %vm245, %v200, 0
      %v546 = vsel %vm245, %v201, 0
      %v549 = vsel %vm245, %v202, 0
      %551 = vmatprep.subr.mxu0 0.0
      %552 = vmatpush1.xpose.msra.mxu0 %v456
      %553 = vmatprep.subr.mxu0 0.0
      %554 = vmatpush1.xpose.msra.mxu0 %v459
      %555 = vmatprep.subr.mxu0 0.0
      %556 = vmatpush1.xpose.msra.mxu0 %v462
      %557 = vmatprep.subr.mxu0 0.0
      %558 = vmatpush1.xpose.msra.mxu0 %v465
      %559 = vmatprep.subr.mxu0 0.0
      %560 = vmatpush1.xpose.msra.mxu0 %v468
      %561 = vmatprep.subr.mxu0 0.0
      %562 = vmatpush1.xpose.msra.mxu0 %v471
      %563 = vmatprep.subr.mxu0 0.0
      %564 = vmatpush1.xpose.msra.mxu0 %v474
      %565 = vmatprep.subr.mxu0 0.0
      %566 = vmatpush1.xpose.msra.mxu0 %v477
      %567 = vmatprep.subr.mxu0 0.0
      %568 = vmatpush1.xpose.msra.mxu0 %v480
      %569 = vmatprep.subr.mxu0 0.0
      %570 = vmatpush1.xpose.msra.mxu0 %v483
      %571 = vmatprep.subr.mxu0 0.0
      %572 = vmatpush1.xpose.msra.mxu0 %v486
      %573 = vmatprep.subr.mxu0 0.0
      %574 = vmatpush1.xpose.msra.mxu0 %v489
      %575 = vmatprep.subr.mxu0 0.0
      %576 = vmatpush1.xpose.msra.mxu0 %v492
      %577 = vmatprep.subr.mxu0 0.0
      %578 = vmatpush1.xpose.msra.mxu0 %v495
      %579 = vmatprep.subr.mxu0 0.0
      %580 = vmatpush1.xpose.msra.mxu0 %v498
      %581 = vmatprep.subr.mxu0 0.0
      %582 = vmatpush1.xpose.msra.mxu0 %v501
      %583 = vmatprep.subr.mxu0 0.0
      %584 = vmatpush1.xpose.msra.mxu0 %v504
      %585 = vmatprep.subr.mxu0 0.0
      %586 = vmatpush1.xpose.msra.mxu0 %v507
      %587 = vmatprep.subr.mxu0 0.0
      %588 = vmatpush1.xpose.msra.mxu0 %v510
      %589 = vmatprep.subr.mxu0 0.0
      %590 = vmatpush1.xpose.msra.mxu0 %v513
      %591 = vmatprep.subr.mxu0 0.0
      %592 = vmatpush1.xpose.msra.mxu0 %v516
      %593 = vmatprep.subr.mxu0 0.0
      %594 = vmatpush1.xpose.msra.mxu0 %v519
      %595 = vmatprep.subr.mxu0 0.0
      %596 = vmatpush1.xpose.msra.mxu0 %v522
      %597 = vmatprep.subr.mxu0 0.0
      %598 = vmatpush1.xpose.msra.mxu0 %v525
      %599 = vmatprep.subr.mxu0 0.0
      %600 = vmatpush1.xpose.msra.mxu0 %v528
      %601 = vmatprep.subr.mxu0 0.0
      %602 = vmatpush1.xpose.msra.mxu0 %v531
      %603 = vmatprep.subr.mxu0 0.0
      %604 = vmatpush1.xpose.msra.mxu0 %v534
      %605 = vmatprep.subr.mxu0 0.0
      %606 = vmatpush1.xpose.msra.mxu0 %v537
      %607 = vmatprep.subr.mxu0 0.0
      %608 = vmatpush1.xpose.msra.mxu0 %v540
      %609 = vmatprep.subr.mxu0 0.0
      %610 = vmatpush1.xpose.msra.mxu0 %v543
      %611 = vmatprep.subr.mxu0 0.0
      %612 = vmatpush1.xpose.msra.mxu0 %v546
      %613 = vmatprep.subr.mxu0 0.0
      %614 = vmatpush1.xpose.msra.mxu0 %v549
      %615 = vmatprep.mubr.f32.mxu0 0.0
      %616 = vmatmul.mubr.f32.gmra.mrb[0].mxu0 %v444
      %v617 = vpop.f32.mrb[0].mxu0
      %v618 = vadd.f32 %v421, %v617
      %v619 = vpop.f32.mrb[0].mxu0
      %v620 = vadd.f32 %v423, %v619
      %621 = vmatprep.mubr.f32.mxu0 0.0
      %622 = vmatmul.mubr.f32.gmra.mrb[0].mxu0 %v447
      %v623 = vpop.f32.mrb[0].mxu0
      %v624 = vadd.f32 %v427, %v623
      %v625 = vpop.f32.mrb[0].mxu0
      %v626 = vadd.f32 %v429, %v625
      %627 = vmatprep.mubr.f32.mxu0 0.0
      %628 = vmatmul.mubr.f32.gmra.mrb[0].mxu0 %v450
      %v629 = vpop.f32.mrb[0].mxu0
      %v630 = vadd.f32 %v433, %v629
      %v631 = vpop.f32.mrb[0].mxu0
      %v632 = vadd.f32 %v435, %v631
      %633 = vmatprep.mubr.f32.mxu0 0.0
      %634 = vmatmul.mubr.f32.gmra.mrb[0].mxu0 %v453
      %v635 = vpop.f32.mrb[0].mxu0
      %v636 = vadd.f32 %v439, %v635
      %v637 = vpop.f32.mrb[0].mxu0
      %v638 = vadd.f32 %v441, %v637
      %639 = vdwg.mxu0
      %v640 = vld [vmem:[%s165 + $0x1] sm:$0xff]
      %v641 = vld [vmem:[%s165 + $0x9] sm:$0xff]
      %v642 = vld [vmem:[%s165 + $0x19] sm:$0xff]
      %v643 = vld [vmem:[%s165 + $0x21] sm:$0xff]
      %v644 = vld [vmem:[%s165 + $0x31] sm:$0xff]
      %v645 = vld [vmem:[%s165 + $0x39] sm:$0xff]
      %v646 = vld [vmem:[%s165 + $0x49] sm:$0xff]
      %v647 = vld [vmem:[%s165 + $0x51] sm:$0xff]
      %v648 = vld [vmem:[%s165 + $0x61] sm:$0xff]
      %v649 = vld [vmem:[%s165 + $0x69] sm:$0xff]
      %v650 = vld [vmem:[%s165 + $0x79] sm:$0xff]
      %v651 = vld [vmem:[%s165 + $0x81] sm:$0xff]
      %v652 = vld [vmem:[%s165 + $0x91] sm:$0xff]
      %v653 = vld [vmem:[%s165 + $0x99] sm:$0xff]
      %v654 = vld [vmem:[%s165 + $0xa9] sm:$0xff]
      %v655 = vld [vmem:[%s165 + $0xb1] sm:$0xff]
      %v656 = vld [vmem:[%s165 + $0xc1] sm:$0xff]
      %v657 = vld [vmem:[%s165 + $0xc9] sm:$0xff]
      %v658 = vld [vmem:[%s165 + $0xd9] sm:$0xff]
      %v659 = vld [vmem:[%s165 + $0xe1] sm:$0xff]
      %v660 = vld [vmem:[%s165 + $0xf1] sm:$0xff]
      %v661 = vld [vmem:[%s165 + $0xf9] sm:$0xff]
      %v662 = vld [vmem:[%s165 + $0x109] sm:$0xff]
      %v663 = vld [vmem:[%s165 + $0x111] sm:$0xff]
      %v664 = vld [vmem:[%s165 + $0x121] sm:$0xff]
      %v665 = vld [vmem:[%s165 + $0x129] sm:$0xff]
      %v666 = vld [vmem:[%s165 + $0x139] sm:$0xff]
      %v667 = vld [vmem:[%s165 + $0x141] sm:$0xff]
      %v668 = vld [vmem:[%s165 + $0x151] sm:$0xff]
      %v669 = vld [vmem:[%s165 + $0x159] sm:$0xff]
      %v670 = vld [vmem:[%s165 + $0x169] sm:$0xff]
      %v671 = vld [vmem:[%s165 + $0x171] sm:$0xff]
      %s672 = scalar_lea.vmem %s1, 64
      %v673 = vld [vmem:[%s672] sm:$0xff]
      %v674 = vld [vmem:[%s672 + $0x8] sm:$0xff]
      %v675 = vld [vmem:[%s672 + $0x10] sm:$0xff]
      %v676 = vld [vmem:[%s672 + $0x18] sm:$0xff]
      %v678 = vsel %vm245, %v673, 0
      %v681 = vsel %vm245, %v674, 0
      %v684 = vsel %vm245, %v675, 0
      %v687 = vsel %vm245, %v676, 0
      %v690 = vsel %vm245, %v640, 0
      %v693 = vsel %vm245, %v641, 0
      %v696 = vsel %vm245, %v642, 0
      %v699 = vsel %vm245, %v643, 0
      %v702 = vsel %vm245, %v644, 0
      %v705 = vsel %vm245, %v645, 0
      %v708 = vsel %vm245, %v646, 0
      %v711 = vsel %vm245, %v647, 0
      %v714 = vsel %vm245, %v648, 0
      %v717 = vsel %vm245, %v649, 0
      %v720 = vsel %vm245, %v650, 0
      %v723 = vsel %vm245, %v651, 0
      %v726 = vsel %vm245, %v652, 0
      %v729 = vsel %vm245, %v653, 0
      %v732 = vsel %vm245, %v654, 0
      %v735 = vsel %vm245, %v655, 0
      %v738 = vsel %vm245, %v656, 0
      %v741 = vsel %vm245, %v657, 0
      %v744 = vsel %vm245, %v658, 0
      %v747 = vsel %vm245, %v659, 0
      %v750 = vsel %vm245, %v660, 0
      %v753 = vsel %vm245, %v661, 0
      %v756 = vsel %vm245, %v662, 0
      %v759 = vsel %vm245, %v663, 0
      %v762 = vsel %vm245, %v664, 0
      %v765 = vsel %vm245, %v665, 0
      %v768 = vsel %vm245, %v666, 0
      %v771 = vsel %vm245, %v667, 0
      %v774 = vsel %vm245, %v668, 0
      %v777 = vsel %vm245, %v669, 0
      %v780 = vsel %vm245, %v670, 0
      %v783 = vsel %vm245, %v671, 0
      %785 = vmatprep.subr.mxu0 0.0
      %786 = vmatpush1.xpose.msra.mxu0 %v690
      %787 = vmatprep.subr.mxu0 0.0
      %788 = vmatpush1.xpose.msra.mxu0 %v693
      %789 = vmatprep.subr.mxu0 0.0
      %790 = vmatpush1.xpose.msra.mxu0 %v696
      %791 = vmatprep.subr.mxu0 0.0
      %792 = vmatpush1.xpose.msra.mxu0 %v699
      %793 = vmatprep.subr.mxu0 0.0
      %794 = vmatpush1.xpose.msra.mxu0 %v702
      %795 = vmatprep.subr.mxu0 0.0
      %796 = vmatpush1.xpose.msra.mxu0 %v705
      %797 = vmatprep.subr.mxu0 0.0
      %798 = vmatpush1.xpose.msra.mxu0 %v708
      %799 = vmatprep.subr.mxu0 0.0
      %800 = vmatpush1.xpose.msra.mxu0 %v711
      %801 = vmatprep.subr.mxu0 0.0
      %802 = vmatpush1.xpose.msra.mxu0 %v714
      %803 = vmatprep.subr.mxu0 0.0
      %804 = vmatpush1.xpose.msra.mxu0 %v717
      %805 = vmatprep.subr.mxu0 0.0
      %806 = vmatpush1.xpose.msra.mxu0 %v720
      %807 = vmatprep.subr.mxu0 0.0
      %808 = vmatpush1.xpose.msra.mxu0 %v723
      %809 = vmatprep.subr.mxu0 0.0
      %810 = vmatpush1.xpose.msra.mxu0 %v726
      %811 = vmatprep.subr.mxu0 0.0
      %812 = vmatpush1.xpose.msra.mxu0 %v729
      %813 = vmatprep.subr.mxu0 0.0
      %814 = vmatpush1.xpose.msra.mxu0 %v732
      %815 = vmatprep.subr.mxu0 0.0
      %816 = vmatpush1.xpose.msra.mxu0 %v735
      %817 = vmatprep.subr.mxu0 0.0
      %818 = vmatpush1.xpose.msra.mxu0 %v738
      %819 = vmatprep.subr.mxu0 0.0
      %820 = vmatpush1.xpose.msra.mxu0 %v741
      %821 = vmatprep.subr.mxu0 0.0
      %822 = vmatpush1.xpose.msra.mxu0 %v744
      %823 = vmatprep.subr.mxu0 0.0
      %824 = vmatpush1.xpose.msra.mxu0 %v747
      %825 = vmatprep.subr.mxu0 0.0
      %826 = vmatpush1.xpose.msra.mxu0 %v750
      %827 = vmatprep.subr.mxu0 0.0
      %828 = vmatpush1.xpose.msra.mxu0 %v753
      %829 = vmatprep.subr.mxu0 0.0
      %830 = vmatpush1.xpose.msra.mxu0 %v756
      %831 = vmatprep.subr.mxu0 0.0
      %832 = vmatpush1.xpose.msra.mxu0 %v759
      %833 = vmatprep.subr.mxu0 0.0
      %834 = vmatpush1.xpose.msra.mxu0 %v762
      %835 = vmatprep.subr.mxu0 0.0
      %836 = vmatpush1.xpose.msra.mxu0 %v765
      %837 = vmatprep.subr.mxu0 0.0
      %838 = vmatpush1.xpose.msra.mxu0 %v768
      %839 = vmatprep.subr.mxu0 0.0
      %840 = vmatpush1.xpose.msra.mxu0 %v771
      %841 = vmatprep.subr.mxu0 0.0
      %842 = vmatpush1.xpose.msra.mxu0 %v774
      %843 = vmatprep.subr.mxu0 0.0
      %844 = vmatpush1.xpose.msra.mxu0 %v777
      %845 = vmatprep.subr.mxu0 0.0
      %846 = vmatpush1.xpose.msra.mxu0 %v780
      %847 = vmatprep.subr.mxu0 0.0
      %848 = vmatpush1.xpose.msra.mxu0 %v783
      %849 = vmatprep.mubr.f32.mxu0 0.0
      %850 = vmatmul.mubr.f32.gmra.mrb[0].mxu0 %v678
      %v851 = vpop.f32.mrb[0].mxu0
      %v852 = vadd.f32 0.0, %v851
      %v853 = vpop.f32.mrb[0].mxu0
      %v854 = vadd.f32 0.0, %v853
      %855 = vmatprep.mubr.f32.mxu0 0.0
      %856 = vmatmul.mubr.f32.gmra.mrb[0].mxu0 %v681
      %v857 = vpop.f32.mrb[0].mxu0
      %v858 = vadd.f32 0.0, %v857
      %v859 = vpop.f32.mrb[0].mxu0
      %v860 = vadd.f32 0.0, %v859
      %861 = vmatprep.mubr.f32.mxu0 0.0
      %862 = vmatmul.mubr.f32.gmra.mrb[0].mxu0 %v684
      %v863 = vpop.f32.mrb[0].mxu0
      %v864 = vadd.f32 0.0, %v863
      %v865 = vpop.f32.mrb[0].mxu0
      %v866 = vadd.f32 0.0, %v865
      %867 = vmatprep.mubr.f32.mxu0 0.0
      %868 = vmatmul.mubr.f32.gmra.mrb[0].mxu0 %v687
      %v869 = vpop.f32.mrb[0].mxu0
      %v870 = vadd.f32 0.0, %v869
      %v871 = vpop.f32.mrb[0].mxu0
      %v872 = vadd.f32 0.0, %v871
      %873 = vdwg.mxu0
      %v874 = vadd.f32 %v618, %v852
      %v875 = vadd.f32 %v620, %v854
      %v876 = vadd.f32 %v624, %v858
      %v877 = vadd.f32 %v626, %v860
      %v878 = vadd.f32 %v630, %v864
      %v879 = vadd.f32 %v632, %v866
      %v880 = vadd.f32 %v636, %v870
      %v881 = vadd.f32 %v638, %v872
      %s882 = scalar_lea.vmem %s165, 816
      %v883 = vld [vmem:[%s882] sm:$0xff]
      %v884 = vld [vmem:[%s882 + $0x8] sm:$0xff]
      %v885 = vld [vmem:[%s882 + $0x18] sm:$0xff]
      %v886 = vld [vmem:[%s882 + $0x20] sm:$0xff]
      %v887 = vld [vmem:[%s882 + $0x30] sm:$0xff]
      %v888 = vld [vmem:[%s882 + $0x38] sm:$0xff]
      %v889 = vld [vmem:[%s882 + $0x48] sm:$0xff]
      %v890 = vld [vmem:[%s882 + $0x50] sm:$0xff]
      %v891 = vld [vmem:[%s882 + $0x60] sm:$0xff]
      %v892 = vld [vmem:[%s882 + $0x68] sm:$0xff]
      %v893 = vld [vmem:[%s882 + $0x78] sm:$0xff]
      %v894 = vld [vmem:[%s882 + $0x80] sm:$0xff]
      %v895 = vld [vmem:[%s882 + $0x90] sm:$0xff]
      %v896 = vld [vmem:[%s882 + $0x98] sm:$0xff]
      %v897 = vld [vmem:[%s882 + $0xa8] sm:$0xff]
      %v898 = vld [vmem:[%s882 + $0xb0] sm:$0xff]
      %v899 = vld [vmem:[%s882 + $0xc0] sm:$0xff]
      %v900 = vld [vmem:[%s882 + $0xc8] sm:$0xff]
      %v901 = vld [vmem:[%s882 + $0xd8] sm:$0xff]
      %v902 = vld [vmem:[%s882 + $0xe0] sm:$0xff]
      %v903 = vld [vmem:[%s882 + $0xf0] sm:$0xff]
      %v904 = vld [vmem:[%s882 + $0xf8] sm:$0xff]
      %v905 = vld [vmem:[%s882 + $0x108] sm:$0xff]
      %v906 = vld [vmem:[%s882 + $0x110] sm:$0xff]
      %v907 = vld [vmem:[%s882 + $0x120] sm:$0xff]
      %v908 = vld [vmem:[%s882 + $0x128] sm:$0xff]
      %v909 = vld [vmem:[%s882 + $0x138] sm:$0xff]
      %v910 = vld [vmem:[%s882 + $0x140] sm:$0xff]
      %v911 = vld [vmem:[%s882 + $0x150] sm:$0xff]
      %v912 = vld [vmem:[%s882 + $0x158] sm:$0xff]
      %v913 = vld [vmem:[%s882 + $0x168] sm:$0xff]
      %v914 = vld [vmem:[%s882 + $0x170] sm:$0xff]
      %s915 = scalar_lea.vmem %s1, 96
      %v916 = vld [vmem:[%s915] sm:$0xff]
      %v917 = vld [vmem:[%s915 + $0x8] sm:$0xff]
      %v918 = vld [vmem:[%s915 + $0x10] sm:$0xff]
      %v919 = vld [vmem:[%s915 + $0x18] sm:$0xff]
      %v921 = vsel %vm245, %v916, 0
      %v924 = vsel %vm245, %v917, 0
      %v927 = vsel %vm245, %v918, 0
      %v930 = vsel %vm245, %v919, 0
      %v933 = vsel %vm245, %v883, 0
      %v936 = vsel %vm245, %v884, 0
      %v939 = vsel %vm245, %v885, 0
      %v942 = vsel %vm245, %v886, 0
      %v945 = vsel %vm245, %v887, 0
      %v948 = vsel %vm245, %v888, 0
      %v951 = vsel %vm245, %v889, 0
      %v954 = vsel %vm245, %v890, 0
      %v957 = vsel %vm245, %v891, 0
      %v960 = vsel %vm245, %v892, 0
      %v963 = vsel %vm245, %v893, 0
      %v966 = vsel %vm245, %v894, 0
      %v969 = vsel %vm245, %v895, 0
      %v972 = vsel %vm245, %v896, 0
      %v975 = vsel %vm245, %v897, 0
      %v978 = vsel %vm245, %v898, 0
      %v981 = vsel %vm245, %v899, 0
      %v984 = vsel %vm245, %v900, 0
      %v987 = vsel %vm245, %v901, 0
      %v990 = vsel %vm245, %v902, 0
      %v993 = vsel %vm245, %v903, 0
      %v996 = vsel %vm245, %v904, 0
      %v999 = vsel %vm245, %v905, 0
      %v1002 = vsel %vm245, %v906, 0
      %v1005 = vsel %vm245, %v907, 0
      %v1008 = vsel %vm245, %v908, 0
      %v1011 = vsel %vm245, %v909, 0
      %v1014 = vsel %vm245, %v910, 0
      %v1017 = vsel %vm245, %v911, 0
      %v1020 = vsel %vm245, %v912, 0
      %v1023 = vsel %vm245, %v913, 0
      %v1026 = vsel %vm245, %v914, 0
      %1028 = vmatprep.subr.mxu0 0.0
      %1029 = vmatpush1.xpose.msra.mxu0 %v933
      %1030 = vmatprep.subr.mxu0 0.0
      %1031 = vmatpush1.xpose.msra.mxu0 %v936
      %1032 = vmatprep.subr.mxu0 0.0
      %1033 = vmatpush1.xpose.msra.mxu0 %v939
      %1034 = vmatprep.subr.mxu0 0.0
      %1035 = vmatpush1.xpose.msra.mxu0 %v942
      %1036 = vmatprep.subr.mxu0 0.0
      %1037 = vmatpush1.xpose.msra.mxu0 %v945
      %1038 = vmatprep.subr.mxu0 0.0
      %1039 = vmatpush1.xpose.msra.mxu0 %v948
      %1040 = vmatprep.subr.mxu0 0.0
      %1041 = vmatpush1.xpose.msra.mxu0 %v951
      %1042 = vmatprep.subr.mxu0 0.0
      %1043 = vmatpush1.xpose.msra.mxu0 %v954
      %1044 = vmatprep.subr.mxu0 0.0
      %1045 = vmatpush1.xpose.msra.mxu0 %v957
      %1046 = vmatprep.subr.mxu0 0.0
      %1047 = vmatpush1.xpose.msra.mxu0 %v960
      %1048 = vmatprep.subr.mxu0 0.0
      %1049 = vmatpush1.xpose.msra.mxu0 %v963
      %1050 = vmatprep.subr.mxu0 0.0
      %1051 = vmatpush1.xpose.msra.mxu0 %v966
      %1052 = vmatprep.subr.mxu0 0.0
      %1053 = vmatpush1.xpose.msra.mxu0 %v969
      %1054 = vmatprep.subr.mxu0 0.0
      %1055 = vmatpush1.xpose.msra.mxu0 %v972
      %1056 = vmatprep.subr.mxu0 0.0
      %1057 = vmatpush1.xpose.msra.mxu0 %v975
      %1058 = vmatprep.subr.mxu0 0.0
      %1059 = vmatpush1.xpose.msra.mxu0 %v978
      %1060 = vmatprep.subr.mxu0 0.0
      %1061 = vmatpush1.xpose.msra.mxu0 %v981
      %1062 = vmatprep.subr.mxu0 0.0
      %1063 = vmatpush1.xpose.msra.mxu0 %v984
      %1064 = vmatprep.subr.mxu0 0.0
      %1065 = vmatpush1.xpose.msra.mxu0 %v987
      %1066 = vmatprep.subr.mxu0 0.0
      %1067 = vmatpush1.xpose.msra.mxu0 %v990
      %1068 = vmatprep.subr.mxu0 0.0
      %1069 = vmatpush1.xpose.msra.mxu0 %v993
      %1070 = vmatprep.subr.mxu0 0.0
      %1071 = vmatpush1.xpose.msra.mxu0 %v996
      %1072 = vmatprep.subr.mxu0 0.0
      %1073 = vmatpush1.xpose.msra.mxu0 %v999
      %1074 = vmatprep.subr.mxu0 0.0
      %1075 = vmatpush1.xpose.msra.mxu0 %v1002
      %1076 = vmatprep.subr.mxu0 0.0
      %1077 = vmatpush1.xpose.msra.mxu0 %v1005
      %1078 = vmatprep.subr.mxu0 0.0
      %1079 = vmatpush1.xpose.msra.mxu0 %v1008
      %1080 = vmatprep.subr.mxu0 0.0
      %1081 = vmatpush1.xpose.msra.mxu0 %v1011
      %1082 = vmatprep.subr.mxu0 0.0
      %1083 = vmatpush1.xpose.msra.mxu0 %v1014
      %1084 = vmatprep.subr.mxu0 0.0
      %1085 = vmatpush1.xpose.msra.mxu0 %v1017
      %1086 = vmatprep.subr.mxu0 0.0
      %1087 = vmatpush1.xpose.msra.mxu0 %v1020
      %1088 = vmatprep.subr.mxu0 0.0
      %1089 = vmatpush1.xpose.msra.mxu0 %v1023
      %1090 = vmatprep.subr.mxu0 0.0
      %1091 = vmatpush1.xpose.msra.mxu0 %v1026
      %1092 = vmatprep.mubr.f32.mxu0 0.0
      %1093 = vmatmul.mubr.f32.gmra.mrb[0].mxu0 %v921
      %v1094 = vpop.f32.mrb[0].mxu0
      %v1095 = vadd.f32 0.0, %v1094
      %v1096 = vpop.f32.mrb[0].mxu0
      %v1097 = vadd.f32 0.0, %v1096
      %1098 = vmatprep.mubr.f32.mxu0 0.0
      %1099 = vmatmul.mubr.f32.gmra.mrb[0].mxu0 %v924
      %v1100 = vpop.f32.mrb[0].mxu0
      %v1101 = vadd.f32 0.0, %v1100
      %v1102 = vpop.f32.mrb[0].mxu0
      %v1103 = vadd.f32 0.0, %v1102
      %1104 = vmatprep.mubr.f32.mxu0 0.0
      %1105 = vmatmul.mubr.f32.gmra.mrb[0].mxu0 %v927
      %v1106 = vpop.f32.mrb[0].mxu0
      %v1107 = vadd.f32 0.0, %v1106
      %v1108 = vpop.f32.mrb[0].mxu0
      %v1109 = vadd.f32 0.0, %v1108
      %1110 = vmatprep.mubr.f32.mxu0 0.0
      %1111 = vmatmul.mubr.f32.gmra.mrb[0].mxu0 %v930
      %v1112 = vpop.f32.mrb[0].mxu0
      %v1113 = vadd.f32 0.0, %v1112
      %v1114 = vpop.f32.mrb[0].mxu0
      %v1115 = vadd.f32 0.0, %v1114
      %1116 = vdwg.mxu0
      %v1117 = vadd.f32 %v874, %v1095
      %v1118 = vadd.f32 %v875, %v1097
      %v1119 = vadd.f32 %v876, %v1101
      %v1120 = vadd.f32 %v877, %v1103
      %v1121 = vadd.f32 %v878, %v1107
      %v1122 = vadd.f32 %v879, %v1109
      %v1123 = vadd.f32 %v880, %v1113
      %v1124 = vadd.f32 %v881, %v1115
      %s1125 = scalar_lea.vmem %s165, 1224
      %v1126 = vld [vmem:[%s1125] sm:$0xff]
      %v1127 = vld [vmem:[%s1125 + $0x8] sm:$0xff]
      %v1128 = vld [vmem:[%s1125 + $0x18] sm:$0xff]
      %v1129 = vld [vmem:[%s1125 + $0x20] sm:$0xff]
      %v1130 = vld [vmem:[%s1125 + $0x30] sm:$0xff]
      %v1131 = vld [vmem:[%s1125 + $0x38] sm:$0xff]
      %v1132 = vld [vmem:[%s1125 + $0x48] sm:$0xff]
      %v1133 = vld [vmem:[%s1125 + $0x50] sm:$0xff]
      %v1134 = vld [vmem:[%s1125 + $0x60] sm:$0xff]
      %v1135 = vld [vmem:[%s1125 + $0x68] sm:$0xff]
      %v1136 = vld [vmem:[%s1125 + $0x78] sm:$0xff]
      %v1137 = vld [vmem:[%s1125 + $0x80] sm:$0xff]
      %v1138 = vld [vmem:[%s1125 + $0x90] sm:$0xff]
      %v1139 = vld [vmem:[%s1125 + $0x98] sm:$0xff]
      %v1140 = vld [vmem:[%s1125 + $0xa8] sm:$0xff]
      %v1141 = vld [vmem:[%s1125 + $0xb0] sm:$0xff]
      %v1142 = vld [vmem:[%s1125 + $0xc0] sm:$0xff]
      %v1143 = vld [vmem:[%s1125 + $0xc8] sm:$0xff]
      %v1144 = vld [vmem:[%s1125 + $0xd8] sm:$0xff]
      %v1145 = vld [vmem:[%s1125 + $0xe0] sm:$0xff]
      %v1146 = vld [vmem:[%s1125 + $0xf0] sm:$0xff]
      %v1147 = vld [vmem:[%s1125 + $0xf8] sm:$0xff]
      %v1148 = vld [vmem:[%s1125 + $0x108] sm:$0xff]
      %v1149 = vld [vmem:[%s1125 + $0x110] sm:$0xff]
      %v1150 = vld [vmem:[%s1125 + $0x120] sm:$0xff]
      %v1151 = vld [vmem:[%s1125 + $0x128] sm:$0xff]
      %v1152 = vld [vmem:[%s1125 + $0x138] sm:$0xff]
      %v1153 = vld [vmem:[%s1125 + $0x140] sm:$0xff]
      %v1154 = vld [vmem:[%s1125 + $0x150] sm:$0xff]
      %v1155 = vld [vmem:[%s1125 + $0x158] sm:$0xff]
      %v1156 = vld [vmem:[%s1125 + $0x168] sm:$0xff]
      %v1157 = vld [vmem:[%s1125 + $0x170] sm:$0xff]
      %s1158 = scalar_lea.vmem %s1, 128
      %v1159 = vld [vmem:[%s1158] sm:$0xff]
      %v1160 = vld [vmem:[%s1158 + $0x8] sm:$0xff]
      %v1161 = vld [vmem:[%s1158 + $0x10] sm:$0xff]
      %v1162 = vld [vmem:[%s1158 + $0x18] sm:$0xff]
      %v1164 = vsel %vm245, %v1159, 0
      %v1167 = vsel %vm245, %v1160, 0
      %v1170 = vsel %vm245, %v1161, 0
      %v1173 = vsel %vm245, %v1162, 0
      %v1176 = vsel %vm245, %v1126, 0
      %v1179 = vsel %vm245, %v1127, 0
      %v1182 = vsel %vm245, %v1128, 0
      %v1185 = vsel %vm245, %v1129, 0
      %v1188 = vsel %vm245, %v1130, 0
      %v1191 = vsel %vm245, %v1131, 0
      %v1194 = vsel %vm245, %v1132, 0
      %v1197 = vsel %vm245, %v1133, 0
      %v1200 = vsel %vm245, %v1134, 0
      %v1203 = vsel %vm245, %v1135, 0
      %v1206 = vsel %vm245, %v1136, 0
      %v1209 = vsel %vm245, %v1137, 0
      %v1212 = vsel %vm245, %v1138, 0
      %v1215 = vsel %vm245, %v1139, 0
      %v1218 = vsel %vm245, %v1140, 0
      %v1221 = vsel %vm245, %v1141, 0
      %v1224 = vsel %vm245, %v1142, 0
      %v1227 = vsel %vm245, %v1143, 0
      %v1230 = vsel %vm245, %v1144, 0
      %v1233 = vsel %vm245, %v1145, 0
      %v1236 = vsel %vm245, %v1146, 0
      %v1239 = vsel %vm245, %v1147, 0
      %v1242 = vsel %vm245, %v1148, 0
      %v1245 = vsel %vm245, %v1149, 0
      %v1248 = vsel %vm245, %v1150, 0
      %v1251 = vsel %vm245, %v1151, 0
      %v1254 = vsel %vm245, %v1152, 0
      %v1257 = vsel %vm245, %v1153, 0
      %v1260 = vsel %vm245, %v1154, 0
      %v1263 = vsel %vm245, %v1155, 0
      %v1266 = vsel %vm245, %v1156, 0
      %v1269 = vsel %vm245, %v1157, 0
      %1271 = vmatprep.subr.mxu0 0.0
      %1272 = vmatpush1.xpose.msra.mxu0 %v1176
      %1273 = vmatprep.subr.mxu0 0.0
      %1274 = vmatpush1.xpose.msra.mxu0 %v1179
      %1275 = vmatprep.subr.mxu0 0.0
      %1276 = vmatpush1.xpose.msra.mxu0 %v1182
      %1277 = vmatprep.subr.mxu0 0.0
      %1278 = vmatpush1.xpose.msra.mxu0 %v1185
      %1279 = vmatprep.subr.mxu0 0.0
      %1280 = vmatpush1.xpose.msra.mxu0 %v1188
      %1281 = vmatprep.subr.mxu0 0.0
      %1282 = vmatpush1.xpose.msra.mxu0 %v1191
      %1283 = vmatprep.subr.mxu0 0.0
      %1284 = vmatpush1.xpose.msra.mxu0 %v1194
      %1285 = vmatprep.subr.mxu0 0.0
      %1286 = vmatpush1.xpose.msra.mxu0 %v1197
      %1287 = vmatprep.subr.mxu0 0.0
      %1288 = vmatpush1.xpose.msra.mxu0 %v1200
      %1289 = vmatprep.subr.mxu0 0.0
      %1290 = vmatpush1.xpose.msra.mxu0 %v1203
      %1291 = vmatprep.subr.mxu0 0.0
      %1292 = vmatpush1.xpose.msra.mxu0 %v1206
      %1293 = vmatprep.subr.mxu0 0.0
      %1294 = vmatpush1.xpose.msra.mxu0 %v1209
      %1295 = vmatprep.subr.mxu0 0.0
      %1296 = vmatpush1.xpose.msra.mxu0 %v1212
      %1297 = vmatprep.subr.mxu0 0.0
      %1298 = vmatpush1.xpose.msra.mxu0 %v1215
      %1299 = vmatprep.subr.mxu0 0.0
      %1300 = vmatpush1.xpose.msra.mxu0 %v1218
      %1301 = vmatprep.subr.mxu0 0.0
      %1302 = vmatpush1.xpose.msra.mxu0 %v1221
      %1303 = vmatprep.subr.mxu0 0.0
      %1304 = vmatpush1.xpose.msra.mxu0 %v1224
      %1305 = vmatprep.subr.mxu0 0.0
      %1306 = vmatpush1.xpose.msra.mxu0 %v1227
      %1307 = vmatprep.subr.mxu0 0.0
      %1308 = vmatpush1.xpose.msra.mxu0 %v1230
      %1309 = vmatprep.subr.mxu0 0.0
      %1310 = vmatpush1.xpose.msra.mxu0 %v1233
      %1311 = vmatprep.subr.mxu0 0.0
      %1312 = vmatpush1.xpose.msra.mxu0 %v1236
      %1313 = vmatprep.subr.mxu0 0.0
      %1314 = vmatpush1.xpose.msra.mxu0 %v1239
      %1315 = vmatprep.subr.mxu0 0.0
      %1316 = vmatpush1.xpose.msra.mxu0 %v1242
      %1317 = vmatprep.subr.mxu0 0.0
      %1318 = vmatpush1.xpose.msra.mxu0 %v1245
      %1319 = vmatprep.subr.mxu0 0.0
      %1320 = vmatpush1.xpose.msra.mxu0 %v1248
      %1321 = vmatprep.subr.mxu0 0.0
      %1322 = vmatpush1.xpose.msra.mxu0 %v1251
      %1323 = vmatprep.subr.mxu0 0.0
      %1324 = vmatpush1.xpose.msra.mxu0 %v1254
      %1325 = vmatprep.subr.mxu0 0.0
      %1326 = vmatpush1.xpose.msra.mxu0 %v1257
      %1327 = vmatprep.subr.mxu0 0.0
      %1328 = vmatpush1.xpose.msra.mxu0 %v1260
      %1329 = vmatprep.subr.mxu0 0.0
      %1330 = vmatpush1.xpose.msra.mxu0 %v1263
      %1331 = vmatprep.subr.mxu0 0.0
      %1332 = vmatpush1.xpose.msra.mxu0 %v1266
      %1333 = vmatprep.subr.mxu0 0.0
      %1334 = vmatpush1.xpose.msra.mxu0 %v1269
      %1335 = vmatprep.mubr.f32.mxu0 0.0
      %1336 = vmatmul.mubr.f32.gmra.mrb[0].mxu0 %v1164
      %v1337 = vpop.f32.mrb[0].mxu0
      %v1338 = vadd.f32 0.0, %v1337
      %v1339 = vpop.f32.mrb[0].mxu0
      %v1340 = vadd.f32 0.0, %v1339
      %1341 = vmatprep.mubr.f32.mxu0 0.0
      %1342 = vmatmul.mubr.f32.gmra.mrb[0].mxu0 %v1167
      %v1343 = vpop.f32.mrb[0].mxu0
      %v1344 = vadd.f32 0.0, %v1343
      %v1345 = vpop.f32.mrb[0].mxu0
      %v1346 = vadd.f32 0.0, %v1345
      %1347 = vmatprep.mubr.f32.mxu0 0.0
      %1348 = vmatmul.mubr.f32.gmra.mrb[0].mxu0 %v1170
      %v1349 = vpop.f32.mrb[0].mxu0
      %v1350 = vadd.f32 0.0, %v1349
      %v1351 = vpop.f32.mrb[0].mxu0
      %v1352 = vadd.f32 0.0, %v1351
      %1353 = vmatprep.mubr.f32.mxu0 0.0
      %1354 = vmatmul.mubr.f32.gmra.mrb[0].mxu0 %v1173
      %v1355 = vpop.f32.mrb[0].mxu0
      %v1356 = vadd.f32 0.0, %v1355
      %v1357 = vpop.f32.mrb[0].mxu0
      %v1358 = vadd.f32 0.0, %v1357
      %1359 = vdwg.mxu0
      %v1360 = vadd.f32 %v1117, %v1338
      %v1361 = vadd.f32 %v1118, %v1340
      %v1362 = vadd.f32 %v1119, %v1344
      %v1363 = vadd.f32 %v1120, %v1346
      %v1364 = vadd.f32 %v1121, %v1350
      %v1365 = vadd.f32 %v1122, %v1352
      %v1366 = vadd.f32 %v1123, %v1356
      %v1367 = vadd.f32 %v1124, %v1358
      %v1368 = vld [vmem:[%s882 + $0x1] sm:$0xff]
      %v1369 = vld [vmem:[%s882 + $0x9] sm:$0xff]
      %v1370 = vld [vmem:[%s882 + $0x19] sm:$0xff]
      %v1371 = vld [vmem:[%s882 + $0x21] sm:$0xff]
      %v1372 = vld [vmem:[%s882 + $0x31] sm:$0xff]
      %v1373 = vld [vmem:[%s882 + $0x39] sm:$0xff]
      %v1374 = vld [vmem:[%s882 + $0x49] sm:$0xff]
      %v1375 = vld [vmem:[%s882 + $0x51] sm:$0xff]
      %v1376 = vld [vmem:[%s882 + $0x61] sm:$0xff]
      %v1377 = vld [vmem:[%s882 + $0x69] sm:$0xff]
      %v1378 = vld [vmem:[%s882 + $0x79] sm:$0xff]
      %v1379 = vld [vmem:[%s882 + $0x81] sm:$0xff]
      %v1380 = vld [vmem:[%s882 + $0x91] sm:$0xff]
      %v1381 = vld [vmem:[%s882 + $0x99] sm:$0xff]
      %v1382 = vld [vmem:[%s882 + $0xa9] sm:$0xff]
      %v1383 = vld [vmem:[%s882 + $0xb1] sm:$0xff]
      %v1384 = vld [vmem:[%s882 + $0xc1] sm:$0xff]
      %v1385 = vld [vmem:[%s882 + $0xc9] sm:$0xff]
      %v1386 = vld [vmem:[%s882 + $0xd9] sm:$0xff]
      %v1387 = vld [vmem:[%s882 + $0xe1] sm:$0xff]
      %v1388 = vld [vmem:[%s882 + $0xf1] sm:$0xff]
      %v1389 = vld [vmem:[%s882 + $0xf9] sm:$0xff]
      %v1390 = vld [vmem:[%s882 + $0x109] sm:$0xff]
      %v1391 = vld [vmem:[%s882 + $0x111] sm:$0xff]
      %v1392 = vld [vmem:[%s882 + $0x121] sm:$0xff]
      %v1393 = vld [vmem:[%s882 + $0x129] sm:$0xff]
      %v1394 = vld [vmem:[%s882 + $0x139] sm:$0xff]
      %v1395 = vld [vmem:[%s882 + $0x141] sm:$0xff]
      %v1396 = vld [vmem:[%s882 + $0x151] sm:$0xff]
      %v1397 = vld [vmem:[%s882 + $0x159] sm:$0xff]
      %v1398 = vld [vmem:[%s882 + $0x169] sm:$0xff]
      %v1399 = vld [vmem:[%s882 + $0x171] sm:$0xff]
      %s1400 = scalar_lea.vmem %s1, 160
      %v1401 = vld [vmem:[%s1400] sm:$0xff]
      %v1402 = vld [vmem:[%s1400 + $0x8] sm:$0xff]
      %v1403 = vld [vmem:[%s1400 + $0x10] sm:$0xff]
      %v1404 = vld [vmem:[%s1400 + $0x18] sm:$0xff]
      %v1406 = vsel %vm245, %v1401, 0
      %v1409 = vsel %vm245, %v1402, 0
      %v1412 = vsel %vm245, %v1403, 0
      %v1415 = vsel %vm245, %v1404, 0
      %v1418 = vsel %vm245, %v1368, 0
      %v1421 = vsel %vm245, %v1369, 0
      %v1424 = vsel %vm245, %v1370, 0
      %v1427 = vsel %vm245, %v1371, 0
      %v1430 = vsel %vm245, %v1372, 0
      %v1433 = vsel %vm245, %v1373, 0
      %v1436 = vsel %vm245, %v1374, 0
      %v1439 = vsel %vm245, %v1375, 0
      %v1442 = vsel %vm245, %v1376, 0
      %v1445 = vsel %vm245, %v1377, 0
      %v1448 = vsel %vm245, %v1378, 0
      %v1451 = vsel %vm245, %v1379, 0
      %v1454 = vsel %vm245, %v1380, 0
      %v1457 = vsel %vm245, %v1381, 0
      %v1460 = vsel %vm245, %v1382, 0
      %v1463 = vsel %vm245, %v1383, 0
      %v1466 = vsel %vm245, %v1384, 0
      %v1469 = vsel %vm245, %v1385, 0
      %v1472 = vsel %vm245, %v1386, 0
      %v1475 = vsel %vm245, %v1387, 0
      %v1478 = vsel %vm245, %v1388, 0
      %v1481 = vsel %vm245, %v1389, 0
      %v1484 = vsel %vm245, %v1390, 0
      %v1487 = vsel %vm245, %v1391, 0
      %v1490 = vsel %vm245, %v1392, 0
      %v1493 = vsel %vm245, %v1393, 0
      %v1496 = vsel %vm245, %v1394, 0
      %v1499 = vsel %vm245, %v1395, 0
      %v1502 = vsel %vm245, %v1396, 0
      %v1505 = vsel %vm245, %v1397, 0
      %v1508 = vsel %vm245, %v1398, 0
      %v1511 = vsel %vm245, %v1399, 0
      %1513 = vmatprep.subr.mxu0 0.0
      %1514 = vmatpush1.xpose.msra.mxu0 %v1418
      %1515 = vmatprep.subr.mxu0 0.0
      %1516 = vmatpush1.xpose.msra.mxu0 %v1421
      %1517 = vmatprep.subr.mxu0 0.0
      %1518 = vmatpush1.xpose.msra.mxu0 %v1424
      %1519 = vmatprep.subr.mxu0 0.0
      %1520 = vmatpush1.xpose.msra.mxu0 %v1427
      %1521 = vmatprep.subr.mxu0 0.0
      %1522 = vmatpush1.xpose.msra.mxu0 %v1430
      %1523 = vmatprep.subr.mxu0 0.0
      %1524 = vmatpush1.xpose.msra.mxu0 %v1433
      %1525 = vmatprep.subr.mxu0 0.0
      %1526 = vmatpush1.xpose.msra.mxu0 %v1436
      %1527 = vmatprep.subr.mxu0 0.0
      %1528 = vmatpush1.xpose.msra.mxu0 %v1439
      %1529 = vmatprep.subr.mxu0 0.0
      %1530 = vmatpush1.xpose.msra.mxu0 %v1442
      %1531 = vmatprep.subr.mxu0 0.0
      %1532 = vmatpush1.xpose.msra.mxu0 %v1445
      %1533 = vmatprep.subr.mxu0 0.0
      %1534 = vmatpush1.xpose.msra.mxu0 %v1448
      %1535 = vmatprep.subr.mxu0 0.0
      %1536 = vmatpush1.xpose.msra.mxu0 %v1451
      %1537 = vmatprep.subr.mxu0 0.0
      %1538 = vmatpush1.xpose.msra.mxu0 %v1454
      %1539 = vmatprep.subr.mxu0 0.0
      %1540 = vmatpush1.xpose.msra.mxu0 %v1457
      %1541 = vmatprep.subr.mxu0 0.0
      %1542 = vmatpush1.xpose.msra.mxu0 %v1460
      %1543 = vmatprep.subr.mxu0 0.0
      %1544 = vmatpush1.xpose.msra.mxu0 %v1463
      %1545 = vmatprep.subr.mxu0 0.0
      %1546 = vmatpush1.xpose.msra.mxu0 %v1466
      %1547 = vmatprep.subr.mxu0 0.0
      %1548 = vmatpush1.xpose.msra.mxu0 %v1469
      %1549 = vmatprep.subr.mxu0 0.0
      %1550 = vmatpush1.xpose.msra.mxu0 %v1472
      %1551 = vmatprep.subr.mxu0 0.0
      %1552 = vmatpush1.xpose.msra.mxu0 %v1475
      %1553 = vmatprep.subr.mxu0 0.0
      %1554 = vmatpush1.xpose.msra.mxu0 %v1478
      %1555 = vmatprep.subr.mxu0 0.0
      %1556 = vmatpush1.xpose.msra.mxu0 %v1481
      %1557 = vmatprep.subr.mxu0 0.0
      %1558 = vmatpush1.xpose.msra.mxu0 %v1484
      %1559 = vmatprep.subr.mxu0 0.0
      %1560 = vmatpush1.xpose.msra.mxu0 %v1487
      %1561 = vmatprep.subr.mxu0 0.0
      %1562 = vmatpush1.xpose.msra.mxu0 %v1490
      %1563 = vmatprep.subr.mxu0 0.0
      %1564 = vmatpush1.xpose.msra.mxu0 %v1493
      %1565 = vmatprep.subr.mxu0 0.0
      %1566 = vmatpush1.xpose.msra.mxu0 %v1496
      %1567 = vmatprep.subr.mxu0 0.0
      %1568 = vmatpush1.xpose.msra.mxu0 %v1499
      %1569 = vmatprep.subr.mxu0 0.0
      %1570 = vmatpush1.xpose.msra.mxu0 %v1502
      %1571 = vmatprep.subr.mxu0 0.0
      %1572 = vmatpush1.xpose.msra.mxu0 %v1505
      %1573 = vmatprep.subr.mxu0 0.0
      %1574 = vmatpush1.xpose.msra.mxu0 %v1508
      %1575 = vmatprep.subr.mxu0 0.0
      %1576 = vmatpush1.xpose.msra.mxu0 %v1511
      %1577 = vmatprep.mubr.f32.mxu0 0.0
      %1578 = vmatmul.mubr.f32.gmra.mrb[0].mxu0 %v1406
      %v1579 = vpop.f32.mrb[0].mxu0
      %v1580 = vadd.f32 0.0, %v1579
      %v1581 = vpop.f32.mrb[0].mxu0
      %v1582 = vadd.f32 0.0, %v1581
      %1583 = vmatprep.mubr.f32.mxu0 0.0
      %1584 = vmatmul.mubr.f32.gmra.mrb[0].mxu0 %v1409
      %v1585 = vpop.f32.mrb[0].mxu0
      %v1586 = vadd.f32 0.0, %v1585
      %v1587 = vpop.f32.mrb[0].mxu0
      %v1588 = vadd.f32 0.0, %v1587
      %1589 = vmatprep.mubr.f32.mxu0 0.0
      %1590 = vmatmul.mubr.f32.gmra.mrb[0].mxu0 %v1412
      %v1591 = vpop.f32.mrb[0].mxu0
      %v1592 = vadd.f32 0.0, %v1591
      %v1593 = vpop.f32.mrb[0].mxu0
      %v1594 = vadd.f32 0.0, %v1593
      %1595 = vmatprep.mubr.f32.mxu0 0.0
      %1596 = vmatmul.mubr.f32.gmra.mrb[0].mxu0 %v1415
      %v1597 = vpop.f32.mrb[0].mxu0
      %v1598 = vadd.f32 0.0, %v1597
      %v1599 = vpop.f32.mrb[0].mxu0
      %v1600 = vadd.f32 0.0, %v1599
      %1601 = vdwg.mxu0
      %v1602 = vadd.f32 %v1360, %v1580
      %v1603 = vadd.f32 %v1361, %v1582
      %v1604 = vadd.f32 %v1362, %v1586
      %v1605 = vadd.f32 %v1363, %v1588
      %v1606 = vadd.f32 %v1364, %v1592
      %v1607 = vadd.f32 %v1365, %v1594
      %v1608 = vadd.f32 %v1366, %v1598
      %v1609 = vadd.f32 %v1367, %v1600
      %s1610 = scalar_lea.vmem %s165, 24
      %v1611 = vld [vmem:[%s1610] sm:$0xff]
      %v1612 = vld [vmem:[%s1610 + $0x8] sm:$0xff]
      %v1613 = vld [vmem:[%s1610 + $0x18] sm:$0xff]
      %v1614 = vld [vmem:[%s1610 + $0x20] sm:$0xff]
      %v1615 = vld [vmem:[%s1610 + $0x30] sm:$0xff]
      %v1616 = vld [vmem:[%s1610 + $0x38] sm:$0xff]
      %v1617 = vld [vmem:[%s1610 + $0x48] sm:$0xff]
      %v1618 = vld [vmem:[%s1610 + $0x50] sm:$0xff]
      %v1619 = vld [vmem:[%s1610 + $0x60] sm:$0xff]
      %v1620 = vld [vmem:[%s1610 + $0x68] sm:$0xff]
      %v1621 = vld [vmem:[%s1610 + $0x78] sm:$0xff]
      %v1622 = vld [vmem:[%s1610 + $0x80] sm:$0xff]
      %v1623 = vld [vmem:[%s1610 + $0x90] sm:$0xff]
      %v1624 = vld [vmem:[%s1610 + $0x98] sm:$0xff]
      %v1625 = vld [vmem:[%s1610 + $0xa8] sm:$0xff]
      %v1626 = vld [vmem:[%s1610 + $0xb0] sm:$0xff]
      %v1627 = vld [vmem:[%s1610 + $0xc0] sm:$0xff]
      %v1628 = vld [vmem:[%s1610 + $0xc8] sm:$0xff]
      %v1629 = vld [vmem:[%s1610 + $0xd8] sm:$0xff]
      %v1630 = vld [vmem:[%s1610 + $0xe0] sm:$0xff]
      %v1631 = vld [vmem:[%s1610 + $0xf0] sm:$0xff]
      %v1632 = vld [vmem:[%s1610 + $0xf8] sm:$0xff]
      %v1633 = vld [vmem:[%s1610 + $0x108] sm:$0xff]
      %v1634 = vld [vmem:[%s1610 + $0x110] sm:$0xff]
      %v1635 = vld [vmem:[%s1610 + $0x120] sm:$0xff]
      %v1636 = vld [vmem:[%s1610 + $0x128] sm:$0xff]
      %v1637 = vld [vmem:[%s1610 + $0x138] sm:$0xff]
      %v1638 = vld [vmem:[%s1610 + $0x140] sm:$0xff]
      %v1639 = vld [vmem:[%s1610 + $0x150] sm:$0xff]
      %v1640 = vld [vmem:[%s1610 + $0x158] sm:$0xff]
      %v1641 = vld [vmem:[%s1610 + $0x168] sm:$0xff]
      %v1642 = vld [vmem:[%s1610 + $0x170] sm:$0xff]
      %s1643 = scalar_lea.vmem %s1, 192
      %v1644 = vld [vmem:[%s1643] sm:$0xff]
      %v1645 = vld [vmem:[%s1643 + $0x8] sm:$0xff]
      %v1646 = vld [vmem:[%s1643 + $0x10] sm:$0xff]
      %v1647 = vld [vmem:[%s1643 + $0x18] sm:$0xff]
      %v1649 = vsel %vm245, %v1644, 0
      %v1652 = vsel %vm245, %v1645, 0
      %v1655 = vsel %vm245, %v1646, 0
      %v1658 = vsel %vm245, %v1647, 0
      %v1661 = vsel %vm245, %v1611, 0
      %v1664 = vsel %vm245, %v1612, 0
      %v1667 = vsel %vm245, %v1613, 0
      %v1670 = vsel %vm245, %v1614, 0
      %v1673 = vsel %vm245, %v1615, 0
      %v1676 = vsel %vm245, %v1616, 0
      %v1679 = vsel %vm245, %v1617, 0
      %v1682 = vsel %vm245, %v1618, 0
      %v1685 = vsel %vm245, %v1619, 0
      %v1688 = vsel %vm245, %v1620, 0
      %v1691 = vsel %vm245, %v1621, 0
      %v1694 = vsel %vm245, %v1622, 0
      %v1697 = vsel %vm245, %v1623, 0
      %v1700 = vsel %vm245, %v1624, 0
      %v1703 = vsel %vm245, %v1625, 0
      %v1706 = vsel %vm245, %v1626, 0
      %v1709 = vsel %vm245, %v1627, 0
      %v1712 = vsel %vm245, %v1628, 0
      %v1715 = vsel %vm245, %v1629, 0
      %v1718 = vsel %vm245, %v1630, 0
      %v1721 = vsel %vm245, %v1631, 0
      %v1724 = vsel %vm245, %v1632, 0
      %v1727 = vsel %vm245, %v1633, 0
      %v1730 = vsel %vm245, %v1634, 0
      %v1733 = vsel %vm245, %v1635, 0
      %v1736 = vsel %vm245, %v1636, 0
      %v1739 = vsel %vm245, %v1637, 0
      %v1742 = vsel %vm245, %v1638, 0
      %v1745 = vsel %vm245, %v1639, 0
      %v1748 = vsel %vm245, %v1640, 0
      %v1751 = vsel %vm245, %v1641, 0
      %v1754 = vsel %vm245, %v1642, 0
      %1756 = vmatprep.subr.mxu0 0.0
      %1757 = vmatpush1.xpose.msra.mxu0 %v1661
      %1758 = vmatprep.subr.mxu0 0.0
      %1759 = vmatpush1.xpose.msra.mxu0 %v1664
      %1760 = vmatprep.subr.mxu0 0.0
      %1761 = vmatpush1.xpose.msra.mxu0 %v1667
      %1762 = vmatprep.subr.mxu0 0.0
      %1763 = vmatpush1.xpose.msra.mxu0 %v1670
      %1764 = vmatprep.subr.mxu0 0.0
      %1765 = vmatpush1.xpose.msra.mxu0 %v1673
      %1766 = vmatprep.subr.mxu0 0.0
      %1767 = vmatpush1.xpose.msra.mxu0 %v1676
      %1768 = vmatprep.subr.mxu0 0.0
      %1769 = vmatpush1.xpose.msra.mxu0 %v1679
      %1770 = vmatprep.subr.mxu0 0.0
      %1771 = vmatpush1.xpose.msra.mxu0 %v1682
      %1772 = vmatprep.subr.mxu0 0.0
      %1773 = vmatpush1.xpose.msra.mxu0 %v1685
      %1774 = vmatprep.subr.mxu0 0.0
      %1775 = vmatpush1.xpose.msra.mxu0 %v1688
      %1776 = vmatprep.subr.mxu0 0.0
      %1777 = vmatpush1.xpose.msra.mxu0 %v1691
      %1778 = vmatprep.subr.mxu0 0.0
      %1779 = vmatpush1.xpose.msra.mxu0 %v1694
      %1780 = vmatprep.subr.mxu0 0.0
      %1781 = vmatpush1.xpose.msra.mxu0 %v1697
      %1782 = vmatprep.subr.mxu0 0.0
      %1783 = vmatpush1.xpose.msra.mxu0 %v1700
      %1784 = vmatprep.subr.mxu0 0.0
      %1785 = vmatpush1.xpose.msra.mxu0 %v1703
      %1786 = vmatprep.subr.mxu0 0.0
      %1787 = vmatpush1.xpose.msra.mxu0 %v1706
      %1788 = vmatprep.subr.mxu0 0.0
      %1789 = vmatpush1.xpose.msra.mxu0 %v1709
      %1790 = vmatprep.subr.mxu0 0.0
      %1791 = vmatpush1.xpose.msra.mxu0 %v1712
      %1792 = vmatprep.subr.mxu0 0.0
      %1793 = vmatpush1.xpose.msra.mxu0 %v1715
      %1794 = vmatprep.subr.mxu0 0.0
      %1795 = vmatpush1.xpose.msra.mxu0 %v1718
      %1796 = vmatprep.subr.mxu0 0.0
      %1797 = vmatpush1.xpose.msra.mxu0 %v1721
      %1798 = vmatprep.subr.mxu0 0.0
      %1799 = vmatpush1.xpose.msra.mxu0 %v1724
      %1800 = vmatprep.subr.mxu0 0.0
      %1801 = vmatpush1.xpose.msra.mxu0 %v1727
      %1802 = vmatprep.subr.mxu0 0.0
      %1803 = vmatpush1.xpose.msra.mxu0 %v1730
      %1804 = vmatprep.subr.mxu0 0.0
      %1805 = vmatpush1.xpose.msra.mxu0 %v1733
      %1806 = vmatprep.subr.mxu0 0.0
      %1807 = vmatpush1.xpose.msra.mxu0 %v1736
      %1808 = vmatprep.subr.mxu0 0.0
      %1809 = vmatpush1.xpose.msra.mxu0 %v1739
      %1810 = vmatprep.subr.mxu0 0.0
      %1811 = vmatpush1.xpose.msra.mxu0 %v1742
      %1812 = vmatprep.subr.mxu0 0.0
      %1813 = vmatpush1.xpose.msra.mxu0 %v1745
      %1814 = vmatprep.subr.mxu0 0.0
      %1815 = vmatpush1.xpose.msra.mxu0 %v1748
      %1816 = vmatprep.subr.mxu0 0.0
      %1817 = vmatpush1.xpose.msra.mxu0 %v1751
      %1818 = vmatprep.subr.mxu0 0.0
      %1819 = vmatpush1.xpose.msra.mxu0 %v1754
      %1820 = vmatprep.mubr.f32.mxu0 0.0
      %1821 = vmatmul.mubr.f32.gmra.mrb[0].mxu0 %v1649
      %v1822 = vpop.f32.mrb[0].mxu0
      %v1823 = vadd.f32 0.0, %v1822
      %v1824 = vpop.f32.mrb[0].mxu0
      %v1825 = vadd.f32 0.0, %v1824
      %1826 = vmatprep.mubr.f32.mxu0 0.0
      %1827 = vmatmul.mubr.f32.gmra.mrb[0].mxu0 %v1652
      %v1828 = vpop.f32.mrb[0].mxu0
      %v1829 = vadd.f32 0.0, %v1828
      %v1830 = vpop.f32.mrb[0].mxu0
      %v1831 = vadd.f32 0.0, %v1830
      %1832 = vmatprep.mubr.f32.mxu0 0.0
      %1833 = vmatmul.mubr.f32.gmra.mrb[0].mxu0 %v1655
      %v1834 = vpop.f32.mrb[0].mxu0
      %v1835 = vadd.f32 0.0, %v1834
      %v1836 = vpop.f32.mrb[0].mxu0
      %v1837 = vadd.f32 0.0, %v1836
      %1838 = vmatprep.mubr.f32.mxu0 0.0
      %1839 = vmatmul.mubr.f32.gmra.mrb[0].mxu0 %v1658
      %v1840 = vpop.f32.mrb[0].mxu0
      %v1841 = vadd.f32 0.0, %v1840
      %v1842 = vpop.f32.mrb[0].mxu0
      %v1843 = vadd.f32 0.0, %v1842
      %1844 = vdwg.mxu0
      %v1845 = vadd.f32 %v1602, %v1823
      %v1846 = vadd.f32 %v1603, %v1825
      %v1847 = vadd.f32 %v1604, %v1829
      %v1848 = vadd.f32 %v1605, %v1831
      %v1849 = vadd.f32 %v1606, %v1835
      %v1850 = vadd.f32 %v1607, %v1837
      %v1851 = vadd.f32 %v1608, %v1841
      %v1852 = vadd.f32 %v1609, %v1843
      %s1853 = scalar_lea.vmem %s165, 432
      %v1854 = vld [vmem:[%s1853] sm:$0xff]
      %v1855 = vld [vmem:[%s1853 + $0x8] sm:$0xff]
      %v1856 = vld [vmem:[%s1853 + $0x18] sm:$0xff]
      %v1857 = vld [vmem:[%s1853 + $0x20] sm:$0xff]
      %v1858 = vld [vmem:[%s1853 + $0x30] sm:$0xff]
      %v1859 = vld [vmem:[%s1853 + $0x38] sm:$0xff]
      %v1860 = vld [vmem:[%s1853 + $0x48] sm:$0xff]
      %v1861 = vld [vmem:[%s1853 + $0x50] sm:$0xff]
      %v1862 = vld [vmem:[%s1853 + $0x60] sm:$0xff]
      %v1863 = vld [vmem:[%s1853 + $0x68] sm:$0xff]
      %v1864 = vld [vmem:[%s1853 + $0x78] sm:$0xff]
      %v1865 = vld [vmem:[%s1853 + $0x80] sm:$0xff]
      %v1866 = vld [vmem:[%s1853 + $0x90] sm:$0xff]
      %v1867 = vld [vmem:[%s1853 + $0x98] sm:$0xff]
      %v1868 = vld [vmem:[%s1853 + $0xa8] sm:$0xff]
      %v1869 = vld [vmem:[%s1853 + $0xb0] sm:$0xff]
      %v1870 = vld [vmem:[%s1853 + $0xc0] sm:$0xff]
      %v1871 = vld [vmem:[%s1853 + $0xc8] sm:$0xff]
      %v1872 = vld [vmem:[%s1853 + $0xd8] sm:$0xff]
      %v1873 = vld [vmem:[%s1853 + $0xe0] sm:$0xff]
      %v1874 = vld [vmem:[%s1853 + $0xf0] sm:$0xff]
      %v1875 = vld [vmem:[%s1853 + $0xf8] sm:$0xff]
      %v1876 = vld [vmem:[%s1853 + $0x108] sm:$0xff]
      %v1877 = vld [vmem:[%s1853 + $0x110] sm:$0xff]
      %v1878 = vld [vmem:[%s1853 + $0x120] sm:$0xff]
      %v1879 = vld [vmem:[%s1853 + $0x128] sm:$0xff]
      %v1880 = vld [vmem:[%s1853 + $0x138] sm:$0xff]
      %v1881 = vld [vmem:[%s1853 + $0x140] sm:$0xff]
      %v1882 = vld [vmem:[%s1853 + $0x150] sm:$0xff]
      %v1883 = vld [vmem:[%s1853 + $0x158] sm:$0xff]
      %v1884 = vld [vmem:[%s1853 + $0x168] sm:$0xff]
      %v1885 = vld [vmem:[%s1853 + $0x170] sm:$0xff]
      %s1886 = scalar_lea.vmem %s1, 224
      %v1887 = vld [vmem:[%s1886] sm:$0xff]
      %v1888 = vld [vmem:[%s1886 + $0x8] sm:$0xff]
      %v1889 = vld [vmem:[%s1886 + $0x10] sm:$0xff]
      %v1890 = vld [vmem:[%s1886 + $0x18] sm:$0xff]
      %v1892 = vsel %vm245, %v1887, 0
      %v1895 = vsel %vm245, %v1888, 0
      %v1898 = vsel %vm245, %v1889, 0
      %v1901 = vsel %vm245, %v1890, 0
      %v1904 = vsel %vm245, %v1854, 0
      %v1907 = vsel %vm245, %v1855, 0
      %v1910 = vsel %vm245, %v1856, 0
      %v1913 = vsel %vm245, %v1857, 0
      %v1916 = vsel %vm245, %v1858, 0
      %v1919 = vsel %vm245, %v1859, 0
      %v1922 = vsel %vm245, %v1860, 0
      %v1925 = vsel %vm245, %v1861, 0
      %v1928 = vsel %vm245, %v1862, 0
      %v1931 = vsel %vm245, %v1863, 0
      %v1934 = vsel %vm245, %v1864, 0
      %v1937 = vsel %vm245, %v1865, 0
      %v1940 = vsel %vm245, %v1866, 0
      %v1943 = vsel %vm245, %v1867, 0
      %v1946 = vsel %vm245, %v1868, 0
      %v1949 = vsel %vm245, %v1869, 0
      %v1952 = vsel %vm245, %v1870, 0
      %v1955 = vsel %vm245, %v1871, 0
      %v1958 = vsel %vm245, %v1872, 0
      %v1961 = vsel %vm245, %v1873, 0
      %v1964 = vsel %vm245, %v1874, 0
      %v1967 = vsel %vm245, %v1875, 0
      %v1970 = vsel %vm245, %v1876, 0
      %v1973 = vsel %vm245, %v1877, 0
      %v1976 = vsel %vm245, %v1878, 0
      %v1979 = vsel %vm245, %v1879, 0
      %v1982 = vsel %vm245, %v1880, 0
      %v1985 = vsel %vm245, %v1881, 0
      %v1988 = vsel %vm245, %v1882, 0
      %v1991 = vsel %vm245, %v1883, 0
      %v1994 = vsel %vm245, %v1884, 0
      %v1997 = vsel %vm245, %v1885, 0
      %1999 = vmatprep.subr.mxu0 0.0
      %2000 = vmatpush1.xpose.msra.mxu0 %v1904
      %2001 = vmatprep.subr.mxu0 0.0
      %2002 = vmatpush1.xpose.msra.mxu0 %v1907
      %2003 = vmatprep.subr.mxu0 0.0
      %2004 = vmatpush1.xpose.msra.mxu0 %v1910
      %2005 = vmatprep.subr.mxu0 0.0
      %2006 = vmatpush1.xpose.msra.mxu0 %v1913
      %2007 = vmatprep.subr.mxu0 0.0
      %2008 = vmatpush1.xpose.msra.mxu0 %v1916
      %2009 = vmatprep.subr.mxu0 0.0
      %2010 = vmatpush1.xpose.msra.mxu0 %v1919
      %2011 = vmatprep.subr.mxu0 0.0
      %2012 = vmatpush1.xpose.msra.mxu0 %v1922
      %2013 = vmatprep.subr.mxu0 0.0
      %2014 = vmatpush1.xpose.msra.mxu0 %v1925
      %2015 = vmatprep.subr.mxu0 0.0
      %2016 = vmatpush1.xpose.msra.mxu0 %v1928
      %2017 = vmatprep.subr.mxu0 0.0
      %2018 = vmatpush1.xpose.msra.mxu0 %v1931
      %2019 = vmatprep.subr.mxu0 0.0
      %2020 = vmatpush1.xpose.msra.mxu0 %v1934
      %2021 = vmatprep.subr.mxu0 0.0
      %2022 = vmatpush1.xpose.msra.mxu0 %v1937
      %2023 = vmatprep.subr.mxu0 0.0
      %2024 = vmatpush1.xpose.msra.mxu0 %v1940
      %2025 = vmatprep.subr.mxu0 0.0
      %2026 = vmatpush1.xpose.msra.mxu0 %v1943
      %2027 = vmatprep.subr.mxu0 0.0
      %2028 = vmatpush1.xpose.msra.mxu0 %v1946
      %2029 = vmatprep.subr.mxu0 0.0
      %2030 = vmatpush1.xpose.msra.mxu0 %v1949
      %2031 = vmatprep.subr.mxu0 0.0
      %2032 = vmatpush1.xpose.msra.mxu0 %v1952
      %2033 = vmatprep.subr.mxu0 0.0
      %2034 = vmatpush1.xpose.msra.mxu0 %v1955
      %2035 = vmatprep.subr.mxu0 0.0
      %2036 = vmatpush1.xpose.msra.mxu0 %v1958
      %2037 = vmatprep.subr.mxu0 0.0
      %2038 = vmatpush1.xpose.msra.mxu0 %v1961
      %2039 = vmatprep.subr.mxu0 0.0
      %2040 = vmatpush1.xpose.msra.mxu0 %v1964
      %2041 = vmatprep.subr.mxu0 0.0
      %2042 = vmatpush1.xpose.msra.mxu0 %v1967
      %2043 = vmatprep.subr.mxu0 0.0
      %2044 = vmatpush1.xpose.msra.mxu0 %v1970
      %2045 = vmatprep.subr.mxu0 0.0
      %2046 = vmatpush1.xpose.msra.mxu0 %v1973
      %2047 = vmatprep.subr.mxu0 0.0
      %2048 = vmatpush1.xpose.msra.mxu0 %v1976
      %2049 = vmatprep.subr.mxu0 0.0
      %2050 = vmatpush1.xpose.msra.mxu0 %v1979
      %2051 = vmatprep.subr.mxu0 0.0
      %2052 = vmatpush1.xpose.msra.mxu0 %v1982
      %2053 = vmatprep.subr.mxu0 0.0
      %2054 = vmatpush1.xpose.msra.mxu0 %v1985
      %2055 = vmatprep.subr.mxu0 0.0
      %2056 = vmatpush1.xpose.msra.mxu0 %v1988
      %2057 = vmatprep.subr.mxu0 0.0
      %2058 = vmatpush1.xpose.msra.mxu0 %v1991
      %2059 = vmatprep.subr.mxu0 0.0
      %2060 = vmatpush1.xpose.msra.mxu0 %v1994
      %2061 = vmatprep.subr.mxu0 0.0
      %2062 = vmatpush1.xpose.msra.mxu0 %v1997
      %2063 = vmatprep.mubr.f32.mxu0 0.0
      %2064 = vmatmul.mubr.f32.gmra.mrb[0].mxu0 %v1892
      %v2065 = vpop.f32.mrb[0].mxu0
      %v2066 = vadd.f32 0.0, %v2065
      %v2067 = vpop.f32.mrb[0].mxu0
      %v2068 = vadd.f32 0.0, %v2067
      %2069 = vmatprep.mubr.f32.mxu0 0.0
      %2070 = vmatmul.mubr.f32.gmra.mrb[0].mxu0 %v1895
      %v2071 = vpop.f32.mrb[0].mxu0
      %v2072 = vadd.f32 0.0, %v2071
      %v2073 = vpop.f32.mrb[0].mxu0
      %v2074 = vadd.f32 0.0, %v2073
      %2075 = vmatprep.mubr.f32.mxu0 0.0
      %2076 = vmatmul.mubr.f32.gmra.mrb[0].mxu0 %v1898
      %v2077 = vpop.f32.mrb[0].mxu0
      %v2078 = vadd.f32 0.0, %v2077
      %v2079 = vpop.f32.mrb[0].mxu0
      %v2080 = vadd.f32 0.0, %v2079
      %2081 = vmatprep.mubr.f32.mxu0 0.0
      %2082 = vmatmul.mubr.f32.gmra.mrb[0].mxu0 %v1901
      %v2083 = vpop.f32.mrb[0].mxu0
      %v2084 = vadd.f32 0.0, %v2083
      %v2085 = vpop.f32.mrb[0].mxu0
      %v2086 = vadd.f32 0.0, %v2085
      %2087 = vdwg.mxu0
      %v2088 = vadd.f32 %v1845, %v2066
      %v2089 = vadd.f32 %v1846, %v2068
      %v2090 = vadd.f32 %v1847, %v2072
      %v2091 = vadd.f32 %v1848, %v2074
      %v2092 = vadd.f32 %v1849, %v2078
      %v2093 = vadd.f32 %v1850, %v2080
      %v2094 = vadd.f32 %v1851, %v2084
      %v2095 = vadd.f32 %v1852, %v2086
      %v2096 = vld [vmem:[%s1610 + $0x1] sm:$0xff]
      %v2097 = vld [vmem:[%s1610 + $0x9] sm:$0xff]
      %v2098 = vld [vmem:[%s1610 + $0x19] sm:$0xff]
      %v2099 = vld [vmem:[%s1610 + $0x21] sm:$0xff]
      %v2100 = vld [vmem:[%s1610 + $0x31] sm:$0xff]
      %v2101 = vld [vmem:[%s1610 + $0x39] sm:$0xff]
      %v2102 = vld [vmem:[%s1610 + $0x49] sm:$0xff]
      %v2103 = vld [vmem:[%s1610 + $0x51] sm:$0xff]
      %v2104 = vld [vmem:[%s1610 + $0x61] sm:$0xff]
      %v2105 = vld [vmem:[%s1610 + $0x69] sm:$0xff]
      %v2106 = vld [vmem:[%s1610 + $0x79] sm:$0xff]
      %v2107 = vld [vmem:[%s1610 + $0x81] sm:$0xff]
      %v2108 = vld [vmem:[%s1610 + $0x91] sm:$0xff]
      %v2109 = vld [vmem:[%s1610 + $0x99] sm:$0xff]
      %v2110 = vld [vmem:[%s1610 + $0xa9] sm:$0xff]
      %v2111 = vld [vmem:[%s1610 + $0xb1] sm:$0xff]
      %v2112 = vld [vmem:[%s1610 + $0xc1] sm:$0xff]
      %v2113 = vld [vmem:[%s1610 + $0xc9] sm:$0xff]
      %v2114 = vld [vmem:[%s1610 + $0xd9] sm:$0xff]
      %v2115 = vld [vmem:[%s1610 + $0xe1] sm:$0xff]
      %v2116 = vld [vmem:[%s1610 + $0xf1] sm:$0xff]
      %v2117 = vld [vmem:[%s1610 + $0xf9] sm:$0xff]
      %v2118 = vld [vmem:[%s1610 + $0x109] sm:$0xff]
      %v2119 = vld [vmem:[%s1610 + $0x111] sm:$0xff]
      %v2120 = vld [vmem:[%s1610 + $0x121] sm:$0xff]
      %v2121 = vld [vmem:[%s1610 + $0x129] sm:$0xff]
      %v2122 = vld [vmem:[%s1610 + $0x139] sm:$0xff]
      %v2123 = vld [vmem:[%s1610 + $0x141] sm:$0xff]
      %v2124 = vld [vmem:[%s1610 + $0x151] sm:$0xff]
      %v2125 = vld [vmem:[%s1610 + $0x159] sm:$0xff]
      %v2126 = vld [vmem:[%s1610 + $0x169] sm:$0xff]
      %v2127 = vld [vmem:[%s1610 + $0x171] sm:$0xff]
      %s2128 = scalar_lea.vmem %s1, 256
      %v2129 = vld [vmem:[%s2128] sm:$0xff]
      %v2130 = vld [vmem:[%s2128 + $0x8] sm:$0xff]
      %v2131 = vld [vmem:[%s2128 + $0x10] sm:$0xff]
      %v2132 = vld [vmem:[%s2128 + $0x18] sm:$0xff]
      %v2134 = vsel %vm245, %v2129, 0
      %v2137 = vsel %vm245, %v2130, 0
      %v2140 = vsel %vm245, %v2131, 0
      %v2143 = vsel %vm245, %v2132, 0
      %v2146 = vsel %vm245, %v2096, 0
      %v2149 = vsel %vm245, %v2097, 0
      %v2152 = vsel %vm245, %v2098, 0
      %v2155 = vsel %vm245, %v2099, 0
      %v2158 = vsel %vm245, %v2100, 0
      %v2161 = vsel %vm245, %v2101, 0
      %v2164 = vsel %vm245, %v2102, 0
      %v2167 = vsel %vm245, %v2103, 0
      %v2170 = vsel %vm245, %v2104, 0
      %v2173 = vsel %vm245, %v2105, 0
      %v2176 = vsel %vm245, %v2106, 0
      %v2179 = vsel %vm245, %v2107, 0
      %v2182 = vsel %vm245, %v2108, 0
      %v2185 = vsel %vm245, %v2109, 0
      %v2188 = vsel %vm245, %v2110, 0
      %v2191 = vsel %vm245, %v2111, 0
      %v2194 = vsel %vm245, %v2112, 0
      %v2197 = vsel %vm245, %v2113, 0
      %v2200 = vsel %vm245, %v2114, 0
      %v2203 = vsel %vm245, %v2115, 0
      %v2206 = vsel %vm245, %v2116, 0
      %v2209 = vsel %vm245, %v2117, 0
      %v2212 = vsel %vm245, %v2118, 0
      %v2215 = vsel %vm245, %v2119, 0
      %v2218 = vsel %vm245, %v2120, 0
      %v2221 = vsel %vm245, %v2121, 0
      %v2224 = vsel %vm245, %v2122, 0
      %v2227 = vsel %vm245, %v2123, 0
      %v2230 = vsel %vm245, %v2124, 0
      %v2233 = vsel %vm245, %v2125, 0
      %v2236 = vsel %vm245, %v2126, 0
      %v2239 = vsel %vm245, %v2127, 0
      %2241 = vmatprep.subr.mxu0 0.0
      %2242 = vmatpush1.xpose.msra.mxu0 %v2146
      %2243 = vmatprep.subr.mxu0 0.0
      %2244 = vmatpush1.xpose.msra.mxu0 %v2149
      %2245 = vmatprep.subr.mxu0 0.0
      %2246 = vmatpush1.xpose.msra.mxu0 %v2152
      %2247 = vmatprep.subr.mxu0 0.0
      %2248 = vmatpush1.xpose.msra.mxu0 %v2155
      %2249 = vmatprep.subr.mxu0 0.0
      %2250 = vmatpush1.xpose.msra.mxu0 %v2158
      %2251 = vmatprep.subr.mxu0 0.0
      %2252 = vmatpush1.xpose.msra.mxu0 %v2161
      %2253 = vmatprep.subr.mxu0 0.0
      %2254 = vmatpush1.xpose.msra.mxu0 %v2164
      %2255 = vmatprep.subr.mxu0 0.0
      %2256 = vmatpush1.xpose.msra.mxu0 %v2167
      %2257 = vmatprep.subr.mxu0 0.0
      %2258 = vmatpush1.xpose.msra.mxu0 %v2170
      %2259 = vmatprep.subr.mxu0 0.0
      %2260 = vmatpush1.xpose.msra.mxu0 %v2173
      %2261 = vmatprep.subr.mxu0 0.0
      %2262 = vmatpush1.xpose.msra.mxu0 %v2176
      %2263 = vmatprep.subr.mxu0 0.0
      %2264 = vmatpush1.xpose.msra.mxu0 %v2179
      %2265 = vmatprep.subr.mxu0 0.0
      %2266 = vmatpush1.xpose.msra.mxu0 %v2182
      %2267 = vmatprep.subr.mxu0 0.0
      %2268 = vmatpush1.xpose.msra.mxu0 %v2185
      %2269 = vmatprep.subr.mxu0 0.0
      %2270 = vmatpush1.xpose.msra.mxu0 %v2188
      %2271 = vmatprep.subr.mxu0 0.0
      %2272 = vmatpush1.xpose.msra.mxu0 %v2191
      %2273 = vmatprep.subr.mxu0 0.0
      %2274 = vmatpush1.xpose.msra.mxu0 %v2194
      %2275 = vmatprep.subr.mxu0 0.0
      %2276 = vmatpush1.xpose.msra.mxu0 %v2197
      %2277 = vmatprep.subr.mxu0 0.0
      %2278 = vmatpush1.xpose.msra.mxu0 %v2200
      %2279 = vmatprep.subr.mxu0 0.0
      %2280 = vmatpush1.xpose.msra.mxu0 %v2203
      %2281 = vmatprep.subr.mxu0 0.0
      %2282 = vmatpush1.xpose.msra.mxu0 %v2206
      %2283 = vmatprep.subr.mxu0 0.0
      %2284 = vmatpush1.xpose.msra.mxu0 %v2209
      %2285 = vmatprep.subr.mxu0 0.0
      %2286 = vmatpush1.xpose.msra.mxu0 %v2212
      %2287 = vmatprep.subr.mxu0 0.0
      %2288 = vmatpush1.xpose.msra.mxu0 %v2215
      %2289 = vmatprep.subr.mxu0 0.0
      %2290 = vmatpush1.xpose.msra.mxu0 %v2218
      %2291 = vmatprep.subr.mxu0 0.0
      %2292 = vmatpush1.xpose.msra.mxu0 %v2221
      %2293 = vmatprep.subr.mxu0 0.0
      %2294 = vmatpush1.xpose.msra.mxu0 %v2224
      %2295 = vmatprep.subr.mxu0 0.0
      %2296 = vmatpush1.xpose.msra.mxu0 %v2227
      %2297 = vmatprep.subr.mxu0 0.0
      %2298 = vmatpush1.xpose.msra.mxu0 %v2230
      %2299 = vmatprep.subr.mxu0 0.0
      %2300 = vmatpush1.xpose.msra.mxu0 %v2233
      %2301 = vmatprep.subr.mxu0 0.0
      %2302 = vmatpush1.xpose.msra.mxu0 %v2236
      %2303 = vmatprep.subr.mxu0 0.0
      %2304 = vmatpush1.xpose.msra.mxu0 %v2239
      %2305 = vmatprep.mubr.f32.mxu0 0.0
      %2306 = vmatmul.mubr.f32.gmra.mrb[0].mxu0 %v2134
      %v2307 = vpop.f32.mrb[0].mxu0
      %v2308 = vadd.f32 0.0, %v2307
      %v2309 = vpop.f32.mrb[0].mxu0
      %v2310 = vadd.f32 0.0, %v2309
      %2311 = vmatprep.mubr.f32.mxu0 0.0
      %2312 = vmatmul.mubr.f32.gmra.mrb[0].mxu0 %v2137
      %v2313 = vpop.f32.mrb[0].mxu0
      %v2314 = vadd.f32 0.0, %v2313
      %v2315 = vpop.f32.mrb[0].mxu0
      %v2316 = vadd.f32 0.0, %v2315
      %2317 = vmatprep.mubr.f32.mxu0 0.0
      %2318 = vmatmul.mubr.f32.gmra.mrb[0].mxu0 %v2140
      %v2319 = vpop.f32.mrb[0].mxu0
      %v2320 = vadd.f32 0.0, %v2319
      %v2321 = vpop.f32.mrb[0].mxu0
      %v2322 = vadd.f32 0.0, %v2321
      %2323 = vmatprep.mubr.f32.mxu0 0.0
      %2324 = vmatmul.mubr.f32.gmra.mrb[0].mxu0 %v2143
      %v2325 = vpop.f32.mrb[0].mxu0
      %v2326 = vadd.f32 0.0, %v2325
      %v2327 = vpop.f32.mrb[0].mxu0
      %v2328 = vadd.f32 0.0, %v2327
      %2329 = vdwg.mxu0
      %v2330 = vadd.f32 %v2088, %v2308
      %v2331 = vadd.f32 %v2089, %v2310
      %v2332 = vadd.f32 %v2090, %v2314
      %v2333 = vadd.f32 %v2091, %v2316
      %v2334 = vadd.f32 %v2092, %v2320
      %v2335 = vadd.f32 %v2093, %v2322
      %v2336 = vadd.f32 %v2094, %v2326
      %v2337 = vadd.f32 %v2095, %v2328
      %v2338 = vld [vmem:[%s2] sm:$0xff]
      %v2339 = vld [vmem:[%s2 + $0x8] sm:$0xff]
      %v2340 = vld [vmem:[%s2 + $0x10] sm:$0xff]
      %v2341 = vld [vmem:[%s2 + $0x18] sm:$0xff]
      %2343 = vset.pattern.permute.xlu0 0
      %2344 = vperm.xlu0 %2343, %v2338
      %v2345 = vpop.permute.xlu0 %2344
      %2348 = vset.pattern.permute.xlu0 0
      %2349 = vperm.xlu0 %2348, %v2339
      %v2350 = vpop.permute.xlu0 %2349
      %2353 = vset.pattern.permute.xlu0 0
      %2354 = vperm.xlu0 %2353, %v2340
      %v2355 = vpop.permute.xlu0 %2354
      %2358 = vset.pattern.permute.xlu0 0
      %2359 = vperm.xlu0 %2358, %v2341
      %v2360 = vpop.permute.xlu0 %2359
      %v2362 = vadd.f32 %v2330, %v2345
      %v2363 = vadd.f32 %v2331, %v2345
      %v2364 = vadd.f32 %v2332, %v2350
      %v2365 = vadd.f32 %v2333, %v2350
      %v2366 = vadd.f32 %v2334, %v2355
      %v2367 = vadd.f32 %v2335, %v2355
      %v2368 = vadd.f32 %v2336, %v2360
      %v2369 = vadd.f32 %v2337, %v2360
      %2370 = vst [vmem:[%s170] sm:$0xff] %v2362
      %2371 = vst [vmem:[%s170 + $0x8] sm:$0xff] %v2363
      %2372 = vst [vmem:[%s170 + $0x10] sm:$0xff] %v2364
      %2373 = vst [vmem:[%s170 + $0x18] sm:$0xff] %v2365
      %2374 = vst [vmem:[%s170 + $0x20] sm:$0xff] %v2366
      %2375 = vst [vmem:[%s170 + $0x28] sm:$0xff] %v2367
      %2376 = vst [vmem:[%s170 + $0x30] sm:$0xff] %v2368
      %2377 = vst [vmem:[%s170 + $0x38] sm:$0xff] %v2369
      %p2378 = scmp.lt.s32.totalorder %s14, 1
      %s2379 = scalar_select %p2378, %s14, 1
      %s2380 = smul.addr %s2379, 8
      %s2381 = smul.addr %s2380, 8
      %s2382 = scalar_lea.vmem %s3, %s2381
      // Predicated region
      $region33: #{model_forward.1} parent=31 // pred_check
        %p2383 = pneg %p100
      $region34: #{model_forward.1} parent=31 // pred_check_branch
        %2385 = sbr.rel (%p2383) target = $region36
      $region35: #{model_forward.1} parent=31 // pred_region
        _
      $region36: #{model_forward.1} parent=31 // pred_fallthru
        _
    $region32: #{model_forward.1} parent=5 // pred_fallthru
      _
    %p2386 = scmp.le.s32.totalorder 2, %s9
    // Predicated region
    $region37: #{model_forward.1} parent=5 // pred_check
      %p2387 = pneg %p2386
    $region38: #{model_forward.1} parent=5 // pred_check_branch
      %2389 = sbr.rel (%p2387) target = $region40
    $region39: #{model_forward.1} parent=5 // pred_region
      %s2390 = ssub.s32 %s9, 2
      // Predicated region
      $region41: #{model_forward.1} parent=39 // pred_check
        %p2391 = pneg %p106
      $region42: #{model_forward.1} parent=39 // pred_check_branch
        %2393 = sbr.rel (%p2391) target = $region44
      $region43: #{model_forward.1} parent=39 // pred_region
        %p2394 = scmp.lt.s32.totalorder %s15, 1
        %s2395 = scalar_select %p2394, %s15, 1
        %s2396 = smul.addr %s2395, 8
        %s2397 = smul.addr %s2396, 8
        %s2398 = scalar_lea.vmem %s3, %s2397
      $region44: #{model_forward.1} parent=39 // pred_fallthru
        _
    $region40: #{model_forward.1} parent=5 // pred_fallthru
      _
  $region6: #{model_forward.1} parent=0 // loop_footer
    %s13 = sadd.s32 1, %s9
  $region7: #{model_forward.1} parent=0 // loop_footer_branch
    %8 = sbr.rel target = $region3
  $region8: #{model_forward.1} parent=0 // loop_exit
    _

</llo_original>
